<compile_context>
chip_gen: v7x
topology: tpu7x:2x2x1
jax: 0.10.0
libtpu: 0.0.40
codegen_flags: <defaults>
</compile_context>

<pallas_src>
import math

import jax
import jax.numpy as jnp
from jax import lax
from jax.experimental import pallas as pl
from jax.experimental.pallas import tpu as pltpu


# ----------------------------- kernel helpers -----------------------------

def _layernorm(x, scale, shift, eps=1e-5):
    # matches torch LayerNorm with unbiased=False variance
    mean = jnp.mean(x, axis=-1, keepdims=True)
    var = jnp.mean((x - mean) ** 2, axis=-1, keepdims=True)
    return scale * ((x - mean) * lax.rsqrt(var + eps)) + shift


def _gelu_tanh(x):
    c = math.sqrt(2.0 / math.pi)
    return 0.5 * x * (1.0 + jnp.tanh(c * (x + 0.044715 * x * x * x)))


# ------------------------------- the kernel -------------------------------

def transformer_block_kernel(x_ref,
                             s1_ref, sh1_ref,
                             wq_ref, wk_ref, wv_ref,        # (1, D, hd) per-head slices
                             wproj_ref, bproj_ref,          # (1, hd, D), (1, D)
                             s2_ref, sh2_ref,
                             w1_ref, b1_ref,
                             w2_ref, b2_ref,
                             o_ref,
                             xn_ref, acc_ref):
    h = pl.program_id(1)
    n_heads = pl.num_programs(1)
    Bt, T, D = x_ref.shape
    N = Bt * T
    cdt = wq_ref.dtype                              # MXU operand dtype (bf16)

    # ---- first head of this batch block: LayerNorm 1 once, zero the attn accumulator ----
    @pl.when(h == 0)
    def _():
        x2d = x_ref[...].astype(jnp.float32).reshape(N, D)      # leading-dim merge
        xn_ref[...] = _layernorm(x2d, s1_ref[...], sh1_ref[...]).astype(cdt)
        acc_ref[...] = jnp.zeros_like(acc_ref)

    xn = xn_ref[...]                                            # (N, D) bf16, cached

    # ---- per-head Q / K / V projections (1/sqrt(hd) already folded into W_q) ----
    q = jnp.dot(xn, wq_ref[0], preferred_element_type=jnp.float32)   # (N, hd)
    k = jnp.dot(xn, wk_ref[0], preferred_element_type=jnp.float32)
    v = jnp.dot(xn, wv_ref[0], preferred_element_type=jnp.float32)
    hd = q.shape[-1]

    qh = q.reshape(Bt, T, hd).astype(cdt)                       # leading-dim split
    kh = k.reshape(Bt, T, hd).astype(cdt)
    vh = v.reshape(Bt, T, hd).astype(cdt)

    # ---- causal attention for this head only: scores are (Bt, T, T), never (H*B, T, T) ----
    scores = jnp.einsum('bqd,bkd->bqk', qh, kh,
                        preferred_element_type=jnp.float32)
    row = lax.broadcasted_iota(jnp.int32, (T, T), 0)
    col = lax.broadcasted_iota(jnp.int32, (T, T), 1)
    scores = jnp.where((row >= col)[None, :, :], scores, -1e30)

    m = jnp.max(scores, axis=-1, keepdims=True)
    p = jnp.exp(scores - m)                                     # unnormalized probabilities
    denom = jnp.sum(p, axis=-1, keepdims=True)

    ctx_un = jnp.einsum('bqk,bkd->bqd', p.astype(cdt), vh,
                        preferred_element_type=jnp.float32)     # (Bt, T, hd)
    ctx = ctx_un * (1.0 / denom)                                # normalize AFTER PV (exact, small)

    # ---- accumulate this head's contribution to the output projection ----
    acc_ref[...] += jnp.dot(ctx.reshape(N, hd).astype(cdt), wproj_ref[0],
                            preferred_element_type=jnp.float32)

    # ---- last head: bias + residual 1, LayerNorm 2, FFN(GELU), residual 2, store ----
    @pl.when(h == n_heads - 1)
    def _():
        x2d = x_ref[...].astype(jnp.float32).reshape(N, D)
        x1 = x2d + acc_ref[...] + bproj_ref[...]                # residual 1 (dropout = identity)

        xn2 = _layernorm(x1, s2_ref[...], sh2_ref[...])
        h1 = jnp.dot(xn2.astype(cdt), w1_ref[...],
                     preferred_element_type=jnp.float32) + b1_ref[...]
        h1 = _gelu_tanh(h1)
        h2 = jnp.dot(h1.astype(cdt), w2_ref[...],
                     preferred_element_type=jnp.float32) + b2_ref[...]

        out = x1 + h2                                           # residual 2
        o_ref[...] = out.reshape(Bt, T, D).astype(o_ref.dtype)


# ------------------------------- the wrapper -------------------------------

def _pick_vmem_limit():
    # generation-aware VMEM budget: ~physical minus headroom (128 MiB on v5e/v6e, 64 MiB on v7x)
    try:
        cap = int(pltpu.get_tpu_info().vmem_capacity_bytes)
    except Exception:
        cap = 64 * 1024 * 1024
    return min(cap, max(32 * 1024 * 1024, cap - 8 * 1024 * 1024))


def transformer_block(x, params, num_heads, *, block_b=None,
                      compute_dtype=jnp.bfloat16):
    s1, sh1, wqkv, wproj, bproj, s2, sh2, w1, b1, w2, b2 = params
    B, T, D = x.shape
    assert D % num_heads == 0, "embed_dim is indivisible by num_heads"
    hd = D // num_heads
    hidden = w1.shape[-1]

    vmem_limit = _pick_vmem_limit()

    if block_b is None:
        # Bound the per-step f32 working set (scores + activations + FFN hidden) to ~1/4 of
        # the VMEM budget, and keep >=2 batch grid steps so the "parallel" batch axis can be
        # sharded across the 2 TensorCores on v7x.  Per-step overhead is only ~0.35 us, so
        # more, smaller steps are cheap.
        per_row = 4 * (T * T + 6 * T * D + 2 * T * hidden)
        block_b = max(1, min(B, (vmem_limit // 4) // max(per_row, 1)))
        if B >= 2:
            block_b = min(block_b, B // 2)
    block_b = max(1, block_b)
    while B % block_b:
        block_b -= 1

    # ---- weight prep (wrapper-side, plain XLA) ----
    # fold 1/sqrt(head_dim) into W_q (free), split the fused QKV weight, and pre-split all
    # attention weights per head so the kernel never lane-slices at sub-128 offsets.
    inv_sqrt_hd = 1.0 / math.sqrt(hd)
    wq = wqkv[:, 0 * D:1 * D] * inv_sqrt_hd
    wk = wqkv[:, 1 * D:2 * D]
    wv = wqkv[:, 2 * D:3 * D]

    def per_head(w):  # (D, D) -> (H, D, hd); head-major feature split matches the torch view
        return jnp.transpose(w.reshape(D, num_heads, hd), (1, 0, 2)).astype(compute_dtype)

    wq_h, wk_h, wv_h = per_head(wq), per_head(wk), per_head(wv)
    wproj_h = wproj.reshape(num_heads, hd, D).astype(compute_dtype)   # rows are head-major
    w1_c, w2_c = w1.astype(compute_dtype), w2.astype(compute_dtype)

    f32 = jnp.float32
    s1_c, sh1_c = s1.astype(f32), sh1.astype(f32)
    s2_c, sh2_c = s2.astype(f32), sh2.astype(f32)
    bproj_c, b1_c, b2_c = bproj.astype(f32), b1.astype(f32), b2.astype(f32)

    def const_spec(shape):
        return pl.BlockSpec(shape, lambda b, h: (0,) * len(shape))

    def head_spec(shape):
        return pl.BlockSpec(shape, lambda b, h: (h,) + (0,) * (len(shape) - 1))

    in_specs = [
        pl.BlockSpec((block_b, T, D), lambda b, h: (b, 0, 0)),   # x (resident across heads)
        const_spec((1, D)), const_spec((1, D)),                  # norm1 scale / shift
        head_spec((1, D, hd)),                                   # W_q^T per head (streamed)
        head_spec((1, D, hd)),                                   # W_k^T per head
        head_spec((1, D, hd)),                                   # W_v^T per head
        head_spec((1, hd, D)),                                   # W_proj^T per head
        const_spec((1, D)),                                      # b_proj
        const_spec((1, D)), const_spec((1, D)),                  # norm2 scale / shift
        const_spec((D, hidden)), const_spec((1, hidden)),        # FF W1^T, b1
        const_spec((hidden, D)), const_spec((1, D)),             # FF W2^T, b2
    ]

    return pl.pallas_call(
        transformer_block_kernel,
        out_shape=jax.ShapeDtypeStruct((B, T, D), x.dtype),
        grid=(B // block_b, num_heads),
        in_specs=in_specs,
        out_specs=pl.BlockSpec((block_b, T, D), lambda b, h: (b, 0, 0)),
        scratch_shapes=[
            pltpu.VMEM((block_b * T, D), compute_dtype),   # cached LayerNorm-1 output
            pltpu.VMEM((block_b * T, D), jnp.float32),     # attention-output accumulator
        ],
        compiler_params=pltpu.CompilerParams(
            dimension_semantics=("parallel", "arbitrary"),  # batch parallel, heads = reduction
            vmem_limit_bytes=vmem_limit,
        ),
    )(x, s1_c, sh1_c, wq_h, wk_h, wv_h, wproj_h, bproj_c,
      s2_c, sh2_c, w1_c, b1_c, w2_c, b2_c)


# --------------------------- pure-JAX reference ----------------------------

def transformer_block_ref(x, params, num_heads):
    s1, sh1, wqkv, wproj, bproj, s2, sh2, w1, b1, w2, b2 = params
    B, T, D = x.shape
    hd = D // num_heads

    def ln(z, scale, shift):
        m = jnp.mean(z, axis=-1, keepdims=True)
        v = jnp.mean((z - m) ** 2, axis=-1, keepdims=True)
        return scale * ((z - m) / jnp.sqrt(v + 1e-5)) + shift

    xn = ln(x, s1, sh1)
    qkv = xn @ wqkv                                     # (B, T, 3D)
    qkv = qkv.reshape(B, T, 3, num_heads, hd).transpose(2, 0, 3, 1, 4)
    q, k, v = qkv[0], qkv[1], qkv[2]                    # (B, H, T, hd)
    scores = jnp.einsum('bhqd,bhkd->bhqk', q, k) / math.sqrt(hd)
    mask = jnp.tril(jnp.ones((T, T), bool))
    scores = jnp.where(mask, scores, -jnp.inf)
    p = jax.nn.softmax(scores, axis=-1)
    ctx = jnp.einsum('bhqk,bhkd->bhqd', p, v)           # (B, H, T, hd)
    ctx = ctx.transpose(0, 2, 1, 3).reshape(B, T, D)
    x1 = x + (ctx @ wproj + bproj)
    xn2 = ln(x1, s2, sh2)
    c = math.sqrt(2.0 / math.pi)
    h = xn2 @ w1 + b1
    h = 0.5 * h * (1.0 + jnp.tanh(c * (h + 0.044715 * h ** 3)))
    return x1 + (h @ w2 + b2)


# ----------------------------------- main -----------------------------------

if __name__ == "__main__":
    # cfg: emb_dim=32, n_heads=4, context_length=8, drop_rate=0.0, qkv_bias=False
    B, T, D, H = 2, 8, 32, 4
    hidden = 4 * D

    key = jax.random.PRNGKey(0)
    keys = jax.random.split(key, 8)

    x = jax.random.normal(keys[0], (B, T, D), jnp.float32)

    # Deterministic parameter init (shapes follow the PyTorch module __init__).
    # Linear weights are stored pre-transposed: (in_dim, out_dim).
    s1 = jnp.ones((1, D), jnp.float32)
    sh1 = jnp.zeros((1, D), jnp.float32)
    wqkv = 0.02 * jax.random.normal(keys[1], (D, 3 * D), jnp.float32)
    wproj = 0.02 * jax.random.normal(keys[2], (D, D), jnp.float32)
    bproj = 0.02 * jax.random.normal(keys[3], (1, D), jnp.float32)
    s2 = jnp.ones((1, D), jnp.float32)
    sh2 = jnp.zeros((1, D), jnp.float32)
    w1 = 0.02 * jax.random.normal(keys[4], (D, hidden), jnp.float32)
    b1 = 0.02 * jax.random.normal(keys[5], (1, hidden), jnp.float32)
    w2 = 0.02 * jax.random.normal(keys[6], (hidden, D), jnp.float32)
    b2 = 0.02 * jax.random.normal(keys[7], (1, D), jnp.float32)

    params = (s1, sh1, wqkv, wproj, bproj, s2, sh2, w1, b1, w2, b2)

    out = transformer_block(x, params, num_heads=H)
    out = jax.block_until_ready(out)

    ref = transformer_block_ref(x, params, num_heads=H)   # f32 reference
    assert out.shape == (B, T, D)
    # bf16 MXU operands (f32 accumulation) -> slightly looser tolerance vs the f32 reference
    assert jnp.allclose(out, ref, atol=2e-2, rtol=2e-2), (
        "Pallas output mismatch vs reference, max err = "
        f"{float(jnp.max(jnp.abs(out - ref)))}")

    print("KERNEL_OK")
</pallas_src>

<mosaic_0001>
module attributes {stable_mosaic.version = 11 : i64} {
  func.func @transformer_block_kernel(%arg0: i32, %arg1: i32, %arg2: memref<1x8x32xf32, #tpu.memory_space<vmem>>, %arg3: memref<1x32xf32, #tpu.memory_space<vmem>>, %arg4: memref<1x32xf32, #tpu.memory_space<vmem>>, %arg5: memref<1x32x8xbf16, #tpu.memory_space<vmem>>, %arg6: memref<1x32x8xbf16, #tpu.memory_space<vmem>>, %arg7: memref<1x32x8xbf16, #tpu.memory_space<vmem>>, %arg8: memref<1x8x32xbf16, #tpu.memory_space<vmem>>, %arg9: memref<1x32xf32, #tpu.memory_space<vmem>>, %arg10: memref<1x32xf32, #tpu.memory_space<vmem>>, %arg11: memref<1x32xf32, #tpu.memory_space<vmem>>, %arg12: memref<32x128xbf16, #tpu.memory_space<vmem>>, %arg13: memref<1x128xf32, #tpu.memory_space<vmem>>, %arg14: memref<128x32xbf16, #tpu.memory_space<vmem>>, %arg15: memref<1x32xf32, #tpu.memory_space<vmem>>, %arg16: memref<1x8x32xf32, #tpu.memory_space<vmem>>, %arg17: memref<8x32xbf16, #tpu.memory_space<vmem>>, %arg18: memref<8x32xf32, #tpu.memory_space<vmem>>) attributes {dimension_semantics = [#tpu.dimension_semantics<parallel>, #tpu.dimension_semantics<arbitrary>], iteration_bounds = array<i64: 2, 4>, scalar_prefetch = 0 : i64, scratch_operands = 2 : i64, tpu.core_type = #tpu.core_type<tc>, window_params = [{transform_indices = @transform_0, window_bounds = array<i64: 1, 8, 32>}, {pipeline_mode = #tpu.pipeline_mode<synchronous>, transform_indices = @transform_1, window_bounds = array<i64: 1, 32>}, {pipeline_mode = #tpu.pipeline_mode<synchronous>, transform_indices = @transform_2, window_bounds = array<i64: 1, 32>}, {transform_indices = @transform_3, window_bounds = array<i64: 1, 32, 8>}, {transform_indices = @transform_4, window_bounds = array<i64: 1, 32, 8>}, {transform_indices = @transform_5, window_bounds = array<i64: 1, 32, 8>}, {transform_indices = @transform_6, window_bounds = array<i64: 1, 8, 32>}, {pipeline_mode = #tpu.pipeline_mode<synchronous>, transform_indices = @transform_7, window_bounds = array<i64: 1, 32>}, {pipeline_mode = #tpu.pipeline_mode<synchronous>, transform_indices = @transform_8, window_bounds = array<i64: 1, 32>}, {pipeline_mode = #tpu.pipeline_mode<synchronous>, transform_indices = @transform_9, window_bounds = array<i64: 1, 32>}, {pipeline_mode = #tpu.pipeline_mode<synchronous>, transform_indices = @transform_10, window_bounds = array<i64: 32, 128>}, {pipeline_mode = #tpu.pipeline_mode<synchronous>, transform_indices = @transform_11, window_bounds = array<i64: 1, 128>}, {pipeline_mode = #tpu.pipeline_mode<synchronous>, transform_indices = @transform_12, window_bounds = array<i64: 128, 32>}, {pipeline_mode = #tpu.pipeline_mode<synchronous>, transform_indices = @transform_13, window_bounds = array<i64: 1, 32>}, {transform_indices = @transform_14, window_bounds = array<i64: 1, 8, 32>}]} {
    %c0_i32 = arith.constant 0 : i32
    %0 = arith.cmpi eq, %arg1, %c0_i32 : i32
    %1 = arith.extui %0 : i1 to i32
    %c0_i32_0 = arith.constant 0 : i32
    %2 = arith.cmpi ne, %1, %c0_i32_0 : i32
    scf.if %2 {
      %c0_28 = arith.constant 0 : index
      %c0_29 = arith.constant 0 : index
      %c0_30 = arith.constant 0 : index
      %50 = vector.load %arg2[%c0_28, %c0_29, %c0_30] : memref<1x8x32xf32, #tpu.memory_space<vmem>>, vector<1x8x32xf32>
      %51 = vector.shape_cast %50 : vector<1x8x32xf32> to vector<8x32xf32>
      %c0_31 = arith.constant 0 : index
      %c0_32 = arith.constant 0 : index
      %52 = vector.load %arg3[%c0_31, %c0_32] : memref<1x32xf32, #tpu.memory_space<vmem>>, vector<1x32xf32>
      %c0_33 = arith.constant 0 : index
      %c0_34 = arith.constant 0 : index
      %53 = vector.load %arg4[%c0_33, %c0_34] : memref<1x32xf32, #tpu.memory_space<vmem>>, vector<1x32xf32>
      %cst_35 = arith.constant dense<0.000000e+00> : vector<8xf32>
      %54 = vector.multi_reduction <add>, %51, %cst_35 [1] : vector<8x32xf32> to vector<8xf32>
      %55 = vector.shape_cast %54 : vector<8xf32> to vector<8x1xf32>
      %cst_36 = arith.constant 3.200000e+01 : f32
      %56 = vector.broadcast %cst_36 : f32 to vector<8x1xf32>
      %57 = arith.divf %55, %56 : vector<8x1xf32>
      %58 = vector.broadcast %57 : vector<8x1xf32> to vector<8x32xf32>
      %59 = arith.subf %51, %58 : vector<8x32xf32>
      %60 = arith.mulf %59, %59 : vector<8x32xf32>
      %cst_37 = arith.constant dense<0.000000e+00> : vector<8xf32>
      %61 = vector.multi_reduction <add>, %60, %cst_37 [1] : vector<8x32xf32> to vector<8xf32>
      %62 = vector.shape_cast %61 : vector<8xf32> to vector<8x1xf32>
      %cst_38 = arith.constant 3.200000e+01 : f32
      %63 = vector.broadcast %cst_38 : f32 to vector<8x1xf32>
      %64 = arith.divf %62, %63 : vector<8x1xf32>
      %65 = vector.broadcast %57 : vector<8x1xf32> to vector<8x32xf32>
      %66 = arith.subf %51, %65 : vector<8x32xf32>
      %cst_39 = arith.constant 9.99999974E-6 : f32
      %67 = vector.broadcast %cst_39 : f32 to vector<8x1xf32>
      %68 = arith.addf %64, %67 : vector<8x1xf32>
      %69 = math.rsqrt %68 : vector<8x1xf32>
      %70 = vector.broadcast %69 : vector<8x1xf32> to vector<8x32xf32>
      %71 = arith.mulf %66, %70 : vector<8x32xf32>
      %72 = vector.broadcast %52 : vector<1x32xf32> to vector<8x32xf32>
      %73 = arith.mulf %72, %71 : vector<8x32xf32>
      %74 = vector.broadcast %53 : vector<1x32xf32> to vector<8x32xf32>
      %75 = arith.addf %73, %74 : vector<8x32xf32>
      %76 = arith.truncf %75 : vector<8x32xf32> to vector<8x32xbf16>
      %c0_40 = arith.constant 0 : index
      %c0_41 = arith.constant 0 : index
      %77 = vector.load %arg17[%c0_40, %c0_41] : memref<8x32xbf16, #tpu.memory_space<vmem>>, vector<8x32xbf16>
      tpu.vector_store %arg17[%c0_40, %c0_41], %76 {strides = array<i32>} : memref<8x32xbf16, #tpu.memory_space<vmem>>, vector<8x32xbf16>,
      %cst_42 = arith.constant 0.000000e+00 : f32
      %78 = vector.broadcast %cst_42 : f32 to vector<8x32xf32>
      %c0_43 = arith.constant 0 : index
      %c0_44 = arith.constant 0 : index
      %79 = vector.load %arg18[%c0_43, %c0_44] : memref<8x32xf32, #tpu.memory_space<vmem>>, vector<8x32xf32>
      tpu.vector_store %arg18[%c0_43, %c0_44], %78 {strides = array<i32>} : memref<8x32xf32, #tpu.memory_space<vmem>>, vector<8x32xf32>,
    } else {
    }
    %c0 = arith.constant 0 : index
    %c0_1 = arith.constant 0 : index
    %3 = vector.load %arg17[%c0, %c0_1] : memref<8x32xbf16, #tpu.memory_space<vmem>>, vector<8x32xbf16>
    %c0_2 = arith.constant 0 : index
    %c0_3 = arith.constant 0 : index
    %c0_4 = arith.constant 0 : index
    %4 = vector.load %arg5[%c0_2, %c0_3, %c0_4] : memref<1x32x8xbf16, #tpu.memory_space<vmem>>, vector<1x32x8xbf16>
    %5 = vector.shape_cast %4 : vector<1x32x8xbf16> to vector<32x8xbf16>
    %cst = arith.constant dense<0.000000e+00> : vector<8x8xf32>
    %6 = tpu.matmul %3, %5, %cst {dimension_numbers = #tpu.dot_dimension_numbers<[1], [0], [0], [1], [0, 0, 1, 1], [], []>} : vector<8x32xbf16>, vector<32x8xbf16>, vector<8x8xf32> -> vector<8x8xf32>
    %c0_5 = arith.constant 0 : index
    %c0_6 = arith.constant 0 : index
    %c0_7 = arith.constant 0 : index
    %7 = vector.load %arg6[%c0_5, %c0_6, %c0_7] : memref<1x32x8xbf16, #tpu.memory_space<vmem>>, vector<1x32x8xbf16>
    %8 = vector.shape_cast %7 : vector<1x32x8xbf16> to vector<32x8xbf16>
    %cst_8 = arith.constant dense<0.000000e+00> : vector<8x8xf32>
    %9 = tpu.matmul %3, %8, %cst_8 {dimension_numbers = #tpu.dot_dimension_numbers<[1], [0], [0], [1], [0, 0, 1, 1], [], []>} : vector<8x32xbf16>, vector<32x8xbf16>, vector<8x8xf32> -> vector<8x8xf32>
    %c0_9 = arith.constant 0 : index
    %c0_10 = arith.constant 0 : index
    %c0_11 = arith.constant 0 : index
    %10 = vector.load %arg7[%c0_9, %c0_10, %c0_11] : memref<1x32x8xbf16, #tpu.memory_space<vmem>>, vector<1x32x8xbf16>
    %11 = vector.shape_cast %10 : vector<1x32x8xbf16> to vector<32x8xbf16>
    %cst_12 = arith.constant dense<0.000000e+00> : vector<8x8xf32>
    %12 = tpu.matmul %3, %11, %cst_12 {dimension_numbers = #tpu.dot_dimension_numbers<[1], [0], [0], [1], [0, 0, 1, 1], [], []>} : vector<8x32xbf16>, vector<32x8xbf16>, vector<8x8xf32> -> vector<8x8xf32>
    %13 = vector.shape_cast %6 : vector<8x8xf32> to vector<1x8x8xf32>
    %14 = arith.truncf %13 : vector<1x8x8xf32> to vector<1x8x8xbf16>
    %15 = vector.shape_cast %9 : vector<8x8xf32> to vector<1x8x8xf32>
    %16 = arith.truncf %15 : vector<1x8x8xf32> to vector<1x8x8xbf16>
    %17 = vector.shape_cast %12 : vector<8x8xf32> to vector<1x8x8xf32>
    %18 = arith.truncf %17 : vector<1x8x8xf32> to vector<1x8x8xbf16>
    "tpu.trace_start"() <{level = 10 : i32, message = "bqd,bkd->bqk"}> : () -> ()
    %cst_13 = arith.constant dense<0.000000e+00> : vector<1x8x8xf32>
    %19 = tpu.matmul %14, %16, %cst_13 {dimension_numbers = #tpu.dot_dimension_numbers<[2], [2], [1], [1], [0, 0, 0, 1, 1, 1], [0], [0]>} : vector<1x8x8xbf16>, vector<1x8x8xbf16>, vector<1x8x8xf32> -> vector<1x8x8xf32>
    "tpu.trace_stop"() : () -> ()
    %20 = tpu.iota {dimensions = array<i32: 0>} : vector<8x8xi32>
    %21 = tpu.iota {dimensions = array<i32: 1>} : vector<8x8xi32>
    %22 = arith.cmpi sge, %20, %21 : vector<8x8xi32>
    %23 = vector.shape_cast %22 : vector<8x8xi1> to vector<1x8x8xi1>
    %cst_14 = arith.constant -1.000000e+30 : f32
    %24 = vector.broadcast %cst_14 : f32 to vector<1x8x8xf32>
    %25 = arith.select %23, %19, %24 : vector<1x8x8xi1>, vector<1x8x8xf32>
    %cst_15 = arith.constant dense<0xFF800000> : vector<1x8xf32>
    %26 = vector.multi_reduction <maximumf>, %25, %cst_15 [2] : vector<1x8x8xf32> to vector<1x8xf32>
    %27 = vector.shape_cast %26 : vector<1x8xf32> to vector<1x8x1xf32>
    %28 = vector.broadcast %27 : vector<1x8x1xf32> to vector<1x8x8xf32>
    %29 = arith.subf %25, %28 : vector<1x8x8xf32>
    %30 = math.exp %29 : vector<1x8x8xf32>
    %cst_16 = arith.constant dense<0.000000e+00> : vector<1x8xf32>
    %31 = vector.multi_reduction <add>, %30, %cst_16 [2] : vector<1x8x8xf32> to vector<1x8xf32>
    %32 = vector.shape_cast %31 : vector<1x8xf32> to vector<1x8x1xf32>
    %33 = arith.truncf %30 : vector<1x8x8xf32> to vector<1x8x8xbf16>
    "tpu.trace_start"() <{level = 10 : i32, message = "bqk,bkd->bqd"}> : () -> ()
    %cst_17 = arith.constant dense<0.000000e+00> : vector<1x8x8xf32>
    %34 = tpu.matmul %33, %18, %cst_17 {dimension_numbers = #tpu.dot_dimension_numbers<[2], [1], [1], [2], [0, 0, 0, 1, 1, 2], [0], [0]>} : vector<1x8x8xbf16>, vector<1x8x8xbf16>, vector<1x8x8xf32> -> vector<1x8x8xf32>
    "tpu.trace_stop"() : () -> ()
    %cst_18 = arith.constant 1.000000e+00 : f32
    %35 = vector.broadcast %cst_18 : f32 to vector<1x8x1xf32>
    %36 = arith.divf %35, %32 : vector<1x8x1xf32>
    %37 = vector.broadcast %36 : vector<1x8x1xf32> to vector<1x8x8xf32>
    %38 = arith.mulf %34, %37 : vector<1x8x8xf32>
    %c0_19 = arith.constant 0 : index
    %c0_20 = arith.constant 0 : index
    %39 = vector.load %arg18[%c0_19, %c0_20] : memref<8x32xf32, #tpu.memory_space<vmem>>, vector<8x32xf32>
    %40 = vector.shape_cast %38 : vector<1x8x8xf32> to vector<8x8xf32>
    %41 = arith.truncf %40 : vector<8x8xf32> to vector<8x8xbf16>
    %c0_21 = arith.constant 0 : index
    %c0_22 = arith.constant 0 : index
    %c0_23 = arith.constant 0 : index
    %42 = vector.load %arg8[%c0_21, %c0_22, %c0_23] : memref<1x8x32xbf16, #tpu.memory_space<vmem>>, vector<1x8x32xbf16>
    %43 = vector.shape_cast %42 : vector<1x8x32xbf16> to vector<8x32xbf16>
    %cst_24 = arith.constant dense<0.000000e+00> : vector<8x32xf32>
    %44 = tpu.matmul %41, %43, %cst_24 {dimension_numbers = #tpu.dot_dimension_numbers<[1], [0], [0], [1], [0, 0, 1, 1], [], []>} : vector<8x8xbf16>, vector<8x32xbf16>, vector<8x32xf32> -> vector<8x32xf32>
    %45 = arith.addf %39, %44 : vector<8x32xf32>
    %c0_25 = arith.constant 0 : index
    %c0_26 = arith.constant 0 : index
    %46 = vector.load %arg18[%c0_25, %c0_26] : memref<8x32xf32, #tpu.memory_space<vmem>>, vector<8x32xf32>
    tpu.vector_store %arg18[%c0_25, %c0_26], %45 {strides = array<i32>} : memref<8x32xf32, #tpu.memory_space<vmem>>, vector<8x32xf32>,
    %c3_i32 = arith.constant 3 : i32
    %47 = arith.cmpi eq, %arg1, %c3_i32 : i32
    %48 = arith.extui %47 : i1 to i32
    %c0_i32_27 = arith.constant 0 : i32
    %49 = arith.cmpi ne, %48, %c0_i32_27 : i32
    scf.if %49 {
      %c0_28 = arith.constant 0 : index
      %c0_29 = arith.constant 0 : index
      %c0_30 = arith.constant 0 : index
      %50 = vector.load %arg2[%c0_28, %c0_29, %c0_30] : memref<1x8x32xf32, #tpu.memory_space<vmem>>, vector<1x8x32xf32>
      %51 = vector.shape_cast %50 : vector<1x8x32xf32> to vector<8x32xf32>
      %c0_31 = arith.constant 0 : index
      %c0_32 = arith.constant 0 : index
      %52 = vector.load %arg18[%c0_31, %c0_32] : memref<8x32xf32, #tpu.memory_space<vmem>>, vector<8x32xf32>
      %53 = arith.addf %51, %52 : vector<8x32xf32>
      %c0_33 = arith.constant 0 : index
      %c0_34 = arith.constant 0 : index
      %54 = vector.load %arg9[%c0_33, %c0_34] : memref<1x32xf32, #tpu.memory_space<vmem>>, vector<1x32xf32>
      %55 = vector.broadcast %54 : vector<1x32xf32> to vector<8x32xf32>
      %56 = arith.addf %53, %55 : vector<8x32xf32>
      %c0_35 = arith.constant 0 : index
      %c0_36 = arith.constant 0 : index
      %57 = vector.load %arg10[%c0_35, %c0_36] : memref<1x32xf32, #tpu.memory_space<vmem>>, vector<1x32xf32>
      %c0_37 = arith.constant 0 : index
      %c0_38 = arith.constant 0 : index
      %58 = vector.load %arg11[%c0_37, %c0_38] : memref<1x32xf32, #tpu.memory_space<vmem>>, vector<1x32xf32>
      %cst_39 = arith.constant dense<0.000000e+00> : vector<8xf32>
      %59 = vector.multi_reduction <add>, %56, %cst_39 [1] : vector<8x32xf32> to vector<8xf32>
      %60 = vector.shape_cast %59 : vector<8xf32> to vector<8x1xf32>
      %cst_40 = arith.constant 3.200000e+01 : f32
      %61 = vector.broadcast %cst_40 : f32 to vector<8x1xf32>
      %62 = arith.divf %60, %61 : vector<8x1xf32>
      %63 = vector.broadcast %62 : vector<8x1xf32> to vector<8x32xf32>
      %64 = arith.subf %56, %63 : vector<8x32xf32>
      %65 = arith.mulf %64, %64 : vector<8x32xf32>
      %cst_41 = arith.constant dense<0.000000e+00> : vector<8xf32>
      %66 = vector.multi_reduction <add>, %65, %cst_41 [1] : vector<8x32xf32> to vector<8xf32>
      %67 = vector.shape_cast %66 : vector<8xf32> to vector<8x1xf32>
      %cst_42 = arith.constant 3.200000e+01 : f32
      %68 = vector.broadcast %cst_42 : f32 to vector<8x1xf32>
      %69 = arith.divf %67, %68 : vector<8x1xf32>
      %70 = vector.broadcast %62 : vector<8x1xf32> to vector<8x32xf32>
      %71 = arith.subf %56, %70 : vector<8x32xf32>
      %cst_43 = arith.constant 9.99999974E-6 : f32
      %72 = vector.broadcast %cst_43 : f32 to vector<8x1xf32>
      %73 = arith.addf %69, %72 : vector<8x1xf32>
      %74 = math.rsqrt %73 : vector<8x1xf32>
      %75 = vector.broadcast %74 : vector<8x1xf32> to vector<8x32xf32>
      %76 = arith.mulf %71, %75 : vector<8x32xf32>
      %77 = vector.broadcast %57 : vector<1x32xf32> to vector<8x32xf32>
      %78 = arith.mulf %77, %76 : vector<8x32xf32>
      %79 = vector.broadcast %58 : vector<1x32xf32> to vector<8x32xf32>
      %80 = arith.addf %78, %79 : vector<8x32xf32>
      %81 = arith.truncf %80 : vector<8x32xf32> to vector<8x32xbf16>
      %c0_44 = arith.constant 0 : index
      %c0_45 = arith.constant 0 : index
      %82 = vector.load %arg12[%c0_44, %c0_45] : memref<32x128xbf16, #tpu.memory_space<vmem>>, vector<32x128xbf16>
      %cst_46 = arith.constant dense<0.000000e+00> : vector<8x128xf32>
      %83 = tpu.matmul %81, %82, %cst_46 {dimension_numbers = #tpu.dot_dimension_numbers<[1], [0], [0], [1], [0, 0, 1, 1], [], []>} : vector<8x32xbf16>, vector<32x128xbf16>, vector<8x128xf32> -> vector<8x128xf32>
      %c0_47 = arith.constant 0 : index
      %c0_48 = arith.constant 0 : index
      %84 = vector.load %arg13[%c0_47, %c0_48] : memref<1x128xf32, #tpu.memory_space<vmem>>, vector<1x128xf32>
      %85 = vector.broadcast %84 : vector<1x128xf32> to vector<8x128xf32>
      %86 = arith.addf %83, %85 : vector<8x128xf32>
      %cst_49 = arith.constant 5.000000e-01 : f32
      %87 = vector.broadcast %cst_49 : f32 to vector<8x128xf32>
      %88 = arith.mulf %87, %86 : vector<8x128xf32>
      %cst_50 = arith.constant 4.471500e-02 : f32
      %89 = vector.broadcast %cst_50 : f32 to vector<8x128xf32>
      %90 = arith.mulf %89, %86 : vector<8x128xf32>
      %91 = arith.mulf %90, %86 : vector<8x128xf32>
      %92 = arith.mulf %91, %86 : vector<8x128xf32>
      %93 = arith.addf %86, %92 : vector<8x128xf32>
      %cst_51 = arith.constant 0.797884583 : f32
      %94 = vector.broadcast %cst_51 : f32 to vector<8x128xf32>
      %95 = arith.mulf %94, %93 : vector<8x128xf32>
      %96 = math.tanh %95 : vector<8x128xf32>
      %cst_52 = arith.constant 1.000000e+00 : f32
      %97 = vector.broadcast %cst_52 : f32 to vector<8x128xf32>
      %98 = arith.addf %97, %96 : vector<8x128xf32>
      %99 = arith.mulf %88, %98 : vector<8x128xf32>
      %100 = arith.truncf %99 : vector<8x128xf32> to vector<8x128xbf16>
      %c0_53 = arith.constant 0 : index
      %c0_54 = arith.constant 0 : index
      %101 = vector.load %arg14[%c0_53, %c0_54] : memref<128x32xbf16, #tpu.memory_space<vmem>>, vector<128x32xbf16>
      %cst_55 = arith.constant dense<0.000000e+00> : vector<8x32xf32>
      %102 = tpu.matmul %100, %101, %cst_55 {dimension_numbers = #tpu.dot_dimension_numbers<[1], [0], [0], [1], [0, 0, 1, 1], [], []>} : vector<8x128xbf16>, vector<128x32xbf16>, vector<8x32xf32> -> vector<8x32xf32>
      %c0_56 = arith.constant 0 : index
      %c0_57 = arith.constant 0 : index
      %103 = vector.load %arg15[%c0_56, %c0_57] : memref<1x32xf32, #tpu.memory_space<vmem>>, vector<1x32xf32>
      %104 = vector.broadcast %103 : vector<1x32xf32> to vector<8x32xf32>
      %105 = arith.addf %102, %104 : vector<8x32xf32>
      %106 = arith.addf %56, %105 : vector<8x32xf32>
      %107 = vector.shape_cast %106 : vector<8x32xf32> to vector<1x8x32xf32>
      %c0_58 = arith.constant 0 : index
      %c0_59 = arith.constant 0 : index
      %c0_60 = arith.constant 0 : index
      %108 = vector.load %arg16[%c0_58, %c0_59, %c0_60] : memref<1x8x32xf32, #tpu.memory_space<vmem>>, vector<1x8x32xf32>
      tpu.vector_store %arg16[%c0_58, %c0_59, %c0_60], %107 {strides = array<i32>} : memref<1x8x32xf32, #tpu.memory_space<vmem>>, vector<1x8x32xf32>,
    } else {
    }
    return
  }
  func.func @transform_0(%arg0: i32, %arg1: i32) -> (i32, i32, i32) {
    %c0_i32 = arith.constant 0 : i32
    %c0_i32_0 = arith.constant 0 : i32
    %c0_i32_1 = arith.constant 0 : i32
    return %arg0, %c0_i32, %c0_i32_0 : i32, i32, i32
  }
  func.func @transform_1(%arg0: i32, %arg1: i32) -> (i32, i32) {
    %c0_i32 = arith.constant 0 : i32
    %c0_i32_0 = arith.constant 0 : i32
    %c0_i32_1 = arith.constant 0 : i32
    return %c0_i32, %c0_i32_0 : i32, i32
  }
  func.func @transform_2(%arg0: i32, %arg1: i32) -> (i32, i32) {
    %c0_i32 = arith.constant 0 : i32
    %c0_i32_0 = arith.constant 0 : i32
    %c0_i32_1 = arith.constant 0 : i32
    return %c0_i32, %c0_i32_0 : i32, i32
  }
  func.func @transform_3(%arg0: i32, %arg1: i32) -> (i32, i32, i32) {
    %c0_i32 = arith.constant 0 : i32
    %c0_i32_0 = arith.constant 0 : i32
    %c0_i32_1 = arith.constant 0 : i32
    return %arg1, %c0_i32, %c0_i32_0 : i32, i32, i32
  }
  func.func @transform_4(%arg0: i32, %arg1: i32) -> (i32, i32, i32) {
    %c0_i32 = arith.constant 0 : i32
    %c0_i32_0 = arith.constant 0 : i32
    %c0_i32_1 = arith.constant 0 : i32
    return %arg1, %c0_i32, %c0_i32_0 : i32, i32, i32
  }
  func.func @transform_5(%arg0: i32, %arg1: i32) -> (i32, i32, i32) {
    %c0_i32 = arith.constant 0 : i32
    %c0_i32_0 = arith.constant 0 : i32
    %c0_i32_1 = arith.constant 0 : i32
    return %arg1, %c0_i32, %c0_i32_0 : i32, i32, i32
  }
  func.func @transform_6(%arg0: i32, %arg1: i32) -> (i32, i32, i32) {
    %c0_i32 = arith.constant 0 : i32
    %c0_i32_0 = arith.constant 0 : i32
    %c0_i32_1 = arith.constant 0 : i32
    return %arg1, %c0_i32, %c0_i32_0 : i32, i32, i32
  }
  func.func @transform_7(%arg0: i32, %arg1: i32) -> (i32, i32) {
    %c0_i32 = arith.constant 0 : i32
    %c0_i32_0 = arith.constant 0 : i32
    %c0_i32_1 = arith.constant 0 : i32
    return %c0_i32, %c0_i32_0 : i32, i32
  }
  func.func @transform_8(%arg0: i32, %arg1: i32) -> (i32, i32) {
    %c0_i32 = arith.constant 0 : i32
    %c0_i32_0 = arith.constant 0 : i32
    %c0_i32_1 = arith.constant 0 : i32
    return %c0_i32, %c0_i32_0 : i32, i32
  }
  func.func @transform_9(%arg0: i32, %arg1: i32) -> (i32, i32) {
    %c0_i32 = arith.constant 0 : i32
    %c0_i32_0 = arith.constant 0 : i32
    %c0_i32_1 = arith.constant 0 : i32
    return %c0_i32, %c0_i32_0 : i32, i32
  }
  func.func @transform_10(%arg0: i32, %arg1: i32) -> (i32, i32) {
    %c0_i32 = arith.constant 0 : i32
    %c0_i32_0 = arith.constant 0 : i32
    %c0_i32_1 = arith.constant 0 : i32
    return %c0_i32, %c0_i32_0 : i32, i32
  }
  func.func @transform_11(%arg0: i32, %arg1: i32) -> (i32, i32) {
    %c0_i32 = arith.constant 0 : i32
    %c0_i32_0 = arith.constant 0 : i32
    %c0_i32_1 = arith.constant 0 : i32
    return %c0_i32, %c0_i32_0 : i32, i32
  }
  func.func @transform_12(%arg0: i32, %arg1: i32) -> (i32, i32) {
    %c0_i32 = arith.constant 0 : i32
    %c0_i32_0 = arith.constant 0 : i32
    %c0_i32_1 = arith.constant 0 : i32
    return %c0_i32, %c0_i32_0 : i32, i32
  }
  func.func @transform_13(%arg0: i32, %arg1: i32) -> (i32, i32) {
    %c0_i32 = arith.constant 0 : i32
    %c0_i32_0 = arith.constant 0 : i32
    %c0_i32_1 = arith.constant 0 : i32
    return %c0_i32, %c0_i32_0 : i32, i32
  }
  func.func @transform_14(%arg0: i32, %arg1: i32) -> (i32, i32, i32) {
    %c0_i32 = arith.constant 0 : i32
    %c0_i32_0 = arith.constant 0 : i32
    %c0_i32_1 = arith.constant 0 : i32
    return %arg0, %c0_i32, %c0_i32_0 : i32, i32, i32
  }
}

</mosaic_0001>

<llo_original>
// kernel: tpu_custom_call.1
$region0: #{tpu_custom_call.1}
  #allocation0 [shape = 'u32[]', space=smem, size = 0x4, offset = 0x4, fixed_abs, tag = 'smem constant byte address 0x4 - core index']
  #allocation1 [shape = 'u32[144,128]{1,0:T(1,128)}', space=vmem, size = 0x12000, scoped, tag = 'internal scratch']
  #allocation2 [shape = 'bf16[8,32]{1,0:T(8,128)(2,1)}', space=vmem, size = 0x800, scoped, tag = 'scratch operand']
  #allocation3 [shape = 'f32[8,32]{1,0:T(8,128)}', space=vmem, size = 0x1000, scoped, tag = 'scratch operand']
  %s0 = inlined_call_operand.vmem [shape: f32[2,8,32], index: 0, kind: input, shape index: {}]
  %s1 = inlined_call_operand.vmem [shape: f32[1,32], index: 1, kind: input, shape index: {}]
  %s2 = inlined_call_operand.vmem [shape: f32[1,32], index: 2, kind: input, shape index: {}]
  %s3 = inlined_call_operand.vmem [shape: bf16[4,32,8], index: 3, kind: input, shape index: {}]
  %s4 = inlined_call_operand.vmem [shape: bf16[4,32,8], index: 4, kind: input, shape index: {}]
  %s5 = inlined_call_operand.vmem [shape: bf16[4,32,8], index: 5, kind: input, shape index: {}]
  %s6 = inlined_call_operand.vmem [shape: bf16[4,8,32], index: 6, kind: input, shape index: {}]
  %s7 = inlined_call_operand.vmem [shape: f32[1,32], index: 7, kind: input, shape index: {}]
  %s8 = inlined_call_operand.vmem [shape: f32[1,32], index: 8, kind: input, shape index: {}]
  %s9 = inlined_call_operand.vmem [shape: f32[1,32], index: 9, kind: input, shape index: {}]
  %s10 = inlined_call_operand.vmem [shape: bf16[32,128], index: 10, kind: input, shape index: {}]
  %s11 = inlined_call_operand.vmem [shape: f32[1,128], index: 11, kind: input, shape index: {}]
  %s12 = inlined_call_operand.vmem [shape: bf16[128,32], index: 12, kind: input, shape index: {}]
  %s13 = inlined_call_operand.vmem [shape: f32[1,32], index: 13, kind: input, shape index: {}]
  %s14 = inlined_call_operand.hbm [shape: f32[2,8,32], index: 14, kind: output, shape index: {}]
  %s15 = sld [smem:[#allocation0]]
  $region97: #{tpu_custom_call.1} parent=0
    _
  %s17 = ssub.s32 1, %s15
  %s18 = scalar_select 0, %s17, %s15
  $region1: #{tpu_custom_call.1} parent=0
    #allocation4 [shape = 'u8[8192]{0}', space=vmem, size = 0x2000, scoped, tag = 'output window, operand 0']
    #allocation5 [shape = 's32[2]{0}', space=sflag, size = 0x8, scoped, tag = 'scoped memory for tpu_custom_call.1']
    %19 = vsyncpa [#allocation5], 0
    %s20 = scalar_lea.sflag [#allocation5], 1
    %21 = vsyncpa %s20, 0
    loop: start=0, step=1, limit=10
    $region2: #{tpu_custom_call.1} parent=1 // loop_pre_header
      _
    $region3: #{tpu_custom_call.1} parent=1 // loop_header
      %s23 = sphi 0, %s27
      %p24 = scmp.ge.s32.totalorder %s23, 10
      %s30 = sphi 0, %s42
      %s31 = sphi 0, %s38
      %s32 = sphi 0, %s30
      %s33 = sphi 0, %s31
      %s34 = sphi 0, %s32
      %s35 = sphi 0, %s33
      %s45 = sphi 0, %s47
      %s48 = sphi 0, %s45
      %s49 = sphi 0, %s48
      %s65 = sphi 0, %s49
      %s69 = sphi 0, %s69
      %s71 = sphi 0, %s69
      %s72 = sphi 0, %s71
      %s86 = sphi 0, %s72
      %s90 = sphi 0, %s90
      %s92 = sphi 0, %s90
      %s93 = sphi 0, %s92
      %s107 = sphi 0, %s93
      %s113 = sphi 0, %s115
      %s116 = sphi 0, %s113
      %s117 = sphi 0, %s116
      %s133 = sphi 0, %s117
      %s139 = sphi 0, %s141
      %s142 = sphi 0, %s139
      %s143 = sphi 0, %s142
      %s159 = sphi 0, %s143
      %s165 = sphi 0, %s167
      %s168 = sphi 0, %s165
      %s169 = sphi 0, %s168
      %s185 = sphi 0, %s169
      %s191 = sphi 0, %s193
      %s194 = sphi 0, %s191
      %s195 = sphi 0, %s194
      %s211 = sphi 0, %s195
      %s215 = sphi 0, %s215
      %s217 = sphi 0, %s215
      %s218 = sphi 0, %s217
      %s232 = sphi 0, %s218
      %s236 = sphi 0, %s236
      %s238 = sphi 0, %s236
      %s239 = sphi 0, %s238
      %s253 = sphi 0, %s239
      %s257 = sphi 0, %s257
      %s259 = sphi 0, %s257
      %s260 = sphi 0, %s259
      %s274 = sphi 0, %s260
      %s278 = sphi 0, %s278
      %s280 = sphi 0, %s278
      %s281 = sphi 0, %s280
      %s295 = sphi 0, %s281
      %s299 = sphi 0, %s299
      %s301 = sphi 0, %s299
      %s302 = sphi 0, %s301
      %s316 = sphi 0, %s302
      %s320 = sphi 0, %s320
      %s322 = sphi 0, %s320
      %s323 = sphi 0, %s322
      %s337 = sphi 0, %s323
      %s341 = sphi 0, %s341
      %s343 = sphi 0, %s341
      %s344 = sphi 0, %s343
      %s358 = sphi 0, %s344
      %s364 = sphi 0, %s366
      %s367 = sphi 0, %s364
      %s368 = sphi 0, %s367
      %s384 = sphi 0, %s368
    $region4: #{tpu_custom_call.1} parent=1 // loop_header_branch
      %26 = sbr.rel (%p24) target = $region8
    $region5: #{tpu_custom_call.1} parent=1 // loop_body
      %s28 = ssub.s32 %s23, 1
      %s29 = ssub.s32 %s23, 2
      %s36 = sadd.s32 1, %s31
      %p37 = scmp.ge.s32.totalorder %s36, 4
      %s38 = scalar_select %p37, 0, %s36
      %s39 = sadd.s32 1, %s30
      %s40 = scalar_select %p37, %s39, %s30
      %p41 = scmp.ge.s32.totalorder %s40, 2
      %s42 = scalar_select %p41, 0, %s40
      %s43 = ssub.s32 %s30, %s42
      %p44 = scmp.eq.s32.totalorder %s43, 0
      %s46 = sadd.s32 %s45, 1
      %s47 = scalar_select %p44, %s45, %s46
      %p50 = pneg %p44
      %p51 = scmp.eq.s32.totalorder %s23, 7
      %p52 = por %p50, %p51
      %p53 = scmp.ne.s32.totalorder %s45, %s48
      %p54 = scmp.eq.s32.totalorder %s23, 0
      %p55 = por %p53, %p54
      %p56 = scmp.ne.s32.totalorder %s45, %s48
      %p57 = scmp.eq.s32.totalorder %s28, 7
      %p58 = por %p56, %p57
      %p59 = scmp.ne.s32.totalorder %s48, %s49
      %p60 = scmp.eq.s32.totalorder %s28, 0
      %p61 = por %p59, %p60
      %p62 = scmp.ne.s32.totalorder %s48, %s49
      %p63 = scmp.eq.s32.totalorder %s29, 7
      %p64 = por %p62, %p63
      %p66 = scmp.ne.s32.totalorder %s49, %s65
      %p67 = scmp.eq.s32.totalorder %s29, 0
      %p68 = por %p66, %p67
      %s70 = sadd.s32 %s69, 1
      %p73 = scmp.eq.s32.totalorder %s23, 7
      %p74 = scmp.ne.s32.totalorder %s69, %s71
      %p75 = scmp.eq.s32.totalorder %s23, 0
      %p76 = por %p74, %p75
      %p77 = scmp.ne.s32.totalorder %s69, %s71
      %p78 = scmp.eq.s32.totalorder %s28, 7
      %p79 = por %p77, %p78
      %p80 = scmp.ne.s32.totalorder %s71, %s72
      %p81 = scmp.eq.s32.totalorder %s28, 0
      %p82 = por %p80, %p81
      %p83 = scmp.ne.s32.totalorder %s71, %s72
      %p84 = scmp.eq.s32.totalorder %s29, 7
      %p85 = por %p83, %p84
      %p87 = scmp.ne.s32.totalorder %s72, %s86
      %p88 = scmp.eq.s32.totalorder %s29, 0
      %p89 = por %p87, %p88
      %s91 = sadd.s32 %s90, 1
      %p94 = scmp.eq.s32.totalorder %s23, 7
      %p95 = scmp.ne.s32.totalorder %s90, %s92
      %p96 = scmp.eq.s32.totalorder %s23, 0
      %p97 = por %p95, %p96
      %p98 = scmp.ne.s32.totalorder %s90, %s92
      %p99 = scmp.eq.s32.totalorder %s28, 7
      %p100 = por %p98, %p99
      %p101 = scmp.ne.s32.totalorder %s92, %s93
      %p102 = scmp.eq.s32.totalorder %s28, 0
      %p103 = por %p101, %p102
      %p104 = scmp.ne.s32.totalorder %s92, %s93
      %p105 = scmp.eq.s32.totalorder %s29, 7
      %p106 = por %p104, %p105
      %p108 = scmp.ne.s32.totalorder %s93, %s107
      %p109 = scmp.eq.s32.totalorder %s29, 0
      %p110 = por %p108, %p109
      %s111 = ssub.s32 %s31, %s38
      %p112 = scmp.eq.s32.totalorder %s111, 0
      %s114 = sadd.s32 %s113, 1
      %s115 = scalar_select %p112, %s113, %s114
      %p118 = pneg %p112
      %p119 = scmp.eq.s32.totalorder %s23, 7
      %p120 = por %p118, %p119
      %p121 = scmp.ne.s32.totalorder %s113, %s116
      %p122 = scmp.eq.s32.totalorder %s23, 0
      %p123 = por %p121, %p122
      %p124 = scmp.ne.s32.totalorder %s113, %s116
      %p125 = scmp.eq.s32.totalorder %s28, 7
      %p126 = por %p124, %p125
      %p127 = scmp.ne.s32.totalorder %s116, %s117
      %p128 = scmp.eq.s32.totalorder %s28, 0
      %p129 = por %p127, %p128
      %p130 = scmp.ne.s32.totalorder %s116, %s117
      %p131 = scmp.eq.s32.totalorder %s29, 7
      %p132 = por %p130, %p131
      %p134 = scmp.ne.s32.totalorder %s117, %s133
      %p135 = scmp.eq.s32.totalorder %s29, 0
      %p136 = por %p134, %p135
      %s137 = ssub.s32 %s31, %s38
      %p138 = scmp.eq.s32.totalorder %s137, 0
      %s140 = sadd.s32 %s139, 1
      %s141 = scalar_select %p138, %s139, %s140
      %p144 = pneg %p138
      %p145 = scmp.eq.s32.totalorder %s23, 7
      %p146 = por %p144, %p145
      %p147 = scmp.ne.s32.totalorder %s139, %s142
      %p148 = scmp.eq.s32.totalorder %s23, 0
      %p149 = por %p147, %p148
      %p150 = scmp.ne.s32.totalorder %s139, %s142
      %p151 = scmp.eq.s32.totalorder %s28, 7
      %p152 = por %p150, %p151
      %p153 = scmp.ne.s32.totalorder %s142, %s143
      %p154 = scmp.eq.s32.totalorder %s28, 0
      %p155 = por %p153, %p154
      %p156 = scmp.ne.s32.totalorder %s142, %s143
      %p157 = scmp.eq.s32.totalorder %s29, 7
      %p158 = por %p156, %p157
      %p160 = scmp.ne.s32.totalorder %s143, %s159
      %p161 = scmp.eq.s32.totalorder %s29, 0
      %p162 = por %p160, %p161
      %s163 = ssub.s32 %s31, %s38
      %p164 = scmp.eq.s32.totalorder %s163, 0
      %s166 = sadd.s32 %s165, 1
      %s167 = scalar_select %p164, %s165, %s166
      %p170 = pneg %p164
      %p171 = scmp.eq.s32.totalorder %s23, 7
      %p172 = por %p170, %p171
      %p173 = scmp.ne.s32.totalorder %s165, %s168
      %p174 = scmp.eq.s32.totalorder %s23, 0
      %p175 = por %p173, %p174
      %p176 = scmp.ne.s32.totalorder %s165, %s168
      %p177 = scmp.eq.s32.totalorder %s28, 7
      %p178 = por %p176, %p177
      %p179 = scmp.ne.s32.totalorder %s168, %s169
      %p180 = scmp.eq.s32.totalorder %s28, 0
      %p181 = por %p179, %p180
      %p182 = scmp.ne.s32.totalorder %s168, %s169
      %p183 = scmp.eq.s32.totalorder %s29, 7
      %p184 = por %p182, %p183
      %p186 = scmp.ne.s32.totalorder %s169, %s185
      %p187 = scmp.eq.s32.totalorder %s29, 0
      %p188 = por %p186, %p187
      %s189 = ssub.s32 %s31, %s38
      %p190 = scmp.eq.s32.totalorder %s189, 0
      %s192 = sadd.s32 %s191, 1
      %s193 = scalar_select %p190, %s191, %s192
      %p196 = pneg %p190
      %p197 = scmp.eq.s32.totalorder %s23, 7
      %p198 = por %p196, %p197
      %p199 = scmp.ne.s32.totalorder %s191, %s194
      %p200 = scmp.eq.s32.totalorder %s23, 0
      %p201 = por %p199, %p200
      %p202 = scmp.ne.s32.totalorder %s191, %s194
      %p203 = scmp.eq.s32.totalorder %s28, 7
      %p204 = por %p202, %p203
      %p205 = scmp.ne.s32.totalorder %s194, %s195
      %p206 = scmp.eq.s32.totalorder %s28, 0
      %p207 = por %p205, %p206
      %p208 = scmp.ne.s32.totalorder %s194, %s195
      %p209 = scmp.eq.s32.totalorder %s29, 7
      %p210 = por %p208, %p209
      %p212 = scmp.ne.s32.totalorder %s195, %s211
      %p213 = scmp.eq.s32.totalorder %s29, 0
      %p214 = por %p212, %p213
      %s216 = sadd.s32 %s215, 1
      %p219 = scmp.eq.s32.totalorder %s23, 7
      %p220 = scmp.ne.s32.totalorder %s215, %s217
      %p221 = scmp.eq.s32.totalorder %s23, 0
      %p222 = por %p220, %p221
      %p223 = scmp.ne.s32.totalorder %s215, %s217
      %p224 = scmp.eq.s32.totalorder %s28, 7
      %p225 = por %p223, %p224
      %p226 = scmp.ne.s32.totalorder %s217, %s218
      %p227 = scmp.eq.s32.totalorder %s28, 0
      %p228 = por %p226, %p227
      %p229 = scmp.ne.s32.totalorder %s217, %s218
      %p230 = scmp.eq.s32.totalorder %s29, 7
      %p231 = por %p229, %p230
      %p233 = scmp.ne.s32.totalorder %s218, %s232
      %p234 = scmp.eq.s32.totalorder %s29, 0
      %p235 = por %p233, %p234
      %s237 = sadd.s32 %s236, 1
      %p240 = scmp.eq.s32.totalorder %s23, 7
      %p241 = scmp.ne.s32.totalorder %s236, %s238
      %p242 = scmp.eq.s32.totalorder %s23, 0
      %p243 = por %p241, %p242
      %p244 = scmp.ne.s32.totalorder %s236, %s238
      %p245 = scmp.eq.s32.totalorder %s28, 7
      %p246 = por %p244, %p245
      %p247 = scmp.ne.s32.totalorder %s238, %s239
      %p248 = scmp.eq.s32.totalorder %s28, 0
      %p249 = por %p247, %p248
      %p250 = scmp.ne.s32.totalorder %s238, %s239
      %p251 = scmp.eq.s32.totalorder %s29, 7
      %p252 = por %p250, %p251
      %p254 = scmp.ne.s32.totalorder %s239, %s253
      %p255 = scmp.eq.s32.totalorder %s29, 0
      %p256 = por %p254, %p255
      %s258 = sadd.s32 %s257, 1
      %p261 = scmp.eq.s32.totalorder %s23, 7
      %p262 = scmp.ne.s32.totalorder %s257, %s259
      %p263 = scmp.eq.s32.totalorder %s23, 0
      %p264 = por %p262, %p263
      %p265 = scmp.ne.s32.totalorder %s257, %s259
      %p266 = scmp.eq.s32.totalorder %s28, 7
      %p267 = por %p265, %p266
      %p268 = scmp.ne.s32.totalorder %s259, %s260
      %p269 = scmp.eq.s32.totalorder %s28, 0
      %p270 = por %p268, %p269
      %p271 = scmp.ne.s32.totalorder %s259, %s260
      %p272 = scmp.eq.s32.totalorder %s29, 7
      %p273 = por %p271, %p272
      %p275 = scmp.ne.s32.totalorder %s260, %s274
      %p276 = scmp.eq.s32.totalorder %s29, 0
      %p277 = por %p275, %p276
      %s279 = sadd.s32 %s278, 1
      %p282 = scmp.eq.s32.totalorder %s23, 7
      %p283 = scmp.ne.s32.totalorder %s278, %s280
      %p284 = scmp.eq.s32.totalorder %s23, 0
      %p285 = por %p283, %p284
      %p286 = scmp.ne.s32.totalorder %s278, %s280
      %p287 = scmp.eq.s32.totalorder %s28, 7
      %p288 = por %p286, %p287
      %p289 = scmp.ne.s32.totalorder %s280, %s281
      %p290 = scmp.eq.s32.totalorder %s28, 0
      %p291 = por %p289, %p290
      %p292 = scmp.ne.s32.totalorder %s280, %s281
      %p293 = scmp.eq.s32.totalorder %s29, 7
      %p294 = por %p292, %p293
      %p296 = scmp.ne.s32.totalorder %s281, %s295
      %p297 = scmp.eq.s32.totalorder %s29, 0
      %p298 = por %p296, %p297
      %s300 = sadd.s32 %s299, 1
      %p303 = scmp.eq.s32.totalorder %s23, 7
      %p304 = scmp.ne.s32.totalorder %s299, %s301
      %p305 = scmp.eq.s32.totalorder %s23, 0
      %p306 = por %p304, %p305
      %p307 = scmp.ne.s32.totalorder %s299, %s301
      %p308 = scmp.eq.s32.totalorder %s28, 7
      %p309 = por %p307, %p308
      %p310 = scmp.ne.s32.totalorder %s301, %s302
      %p311 = scmp.eq.s32.totalorder %s28, 0
      %p312 = por %p310, %p311
      %p313 = scmp.ne.s32.totalorder %s301, %s302
      %p314 = scmp.eq.s32.totalorder %s29, 7
      %p315 = por %p313, %p314
      %p317 = scmp.ne.s32.totalorder %s302, %s316
      %p318 = scmp.eq.s32.totalorder %s29, 0
      %p319 = por %p317, %p318
      %s321 = sadd.s32 %s320, 1
      %p324 = scmp.eq.s32.totalorder %s23, 7
      %p325 = scmp.ne.s32.totalorder %s320, %s322
      %p326 = scmp.eq.s32.totalorder %s23, 0
      %p327 = por %p325, %p326
      %p328 = scmp.ne.s32.totalorder %s320, %s322
      %p329 = scmp.eq.s32.totalorder %s28, 7
      %p330 = por %p328, %p329
      %p331 = scmp.ne.s32.totalorder %s322, %s323
      %p332 = scmp.eq.s32.totalorder %s28, 0
      %p333 = por %p331, %p332
      %p334 = scmp.ne.s32.totalorder %s322, %s323
      %p335 = scmp.eq.s32.totalorder %s29, 7
      %p336 = por %p334, %p335
      %p338 = scmp.ne.s32.totalorder %s323, %s337
      %p339 = scmp.eq.s32.totalorder %s29, 0
      %p340 = por %p338, %p339
      %s342 = sadd.s32 %s341, 1
      %p345 = scmp.eq.s32.totalorder %s23, 7
      %p346 = scmp.ne.s32.totalorder %s341, %s343
      %p347 = scmp.eq.s32.totalorder %s23, 0
      %p348 = por %p346, %p347
      %p349 = scmp.ne.s32.totalorder %s341, %s343
      %p350 = scmp.eq.s32.totalorder %s28, 7
      %p351 = por %p349, %p350
      %p352 = scmp.ne.s32.totalorder %s343, %s344
      %p353 = scmp.eq.s32.totalorder %s28, 0
      %p354 = por %p352, %p353
      %p355 = scmp.ne.s32.totalorder %s343, %s344
      %p356 = scmp.eq.s32.totalorder %s29, 7
      %p357 = por %p355, %p356
      %p359 = scmp.ne.s32.totalorder %s344, %s358
      %p360 = scmp.eq.s32.totalorder %s29, 0
      %p361 = por %p359, %p360
      %s362 = ssub.s32 %s30, %s42
      %p363 = scmp.eq.s32.totalorder %s362, 0
      %s365 = sadd.s32 %s364, 1
      %s366 = scalar_select %p363, %s364, %s365
      %p369 = pneg %p363
      %p370 = scmp.eq.s32.totalorder %s23, 7
      %p371 = por %p369, %p370
      %p372 = scmp.ne.s32.totalorder %s364, %s367
      %p373 = scmp.eq.s32.totalorder %s23, 0
      %p374 = por %p372, %p373
      %p375 = scmp.ne.s32.totalorder %s364, %s367
      %p376 = scmp.eq.s32.totalorder %s28, 7
      %p377 = por %p375, %p376
      %p378 = scmp.ne.s32.totalorder %s367, %s368
      %p379 = scmp.eq.s32.totalorder %s28, 0
      %p380 = por %p378, %p379
      %p381 = scmp.ne.s32.totalorder %s367, %s368
      %p382 = scmp.eq.s32.totalorder %s29, 7
      %p383 = por %p381, %p382
      %p385 = scmp.ne.s32.totalorder %s368, %s384
      %p386 = scmp.eq.s32.totalorder %s29, 0
      %p387 = por %p385, %p386
      %p388 = scmp.le.s32.totalorder 1, %s23
      %p389 = scmp.lt.s32.totalorder %s23, 9
      %p390 = pnand %p388, %p389
      %p391 = pneg %p390
      // Predicated region
      $region9: #{tpu_custom_call.1} parent=5 // pred_check
        _
      $region10: #{tpu_custom_call.1} parent=5 // pred_check_branch
        %393 = sbr.rel (%p390) target = $region12
      $region11: #{tpu_custom_call.1} parent=5 // pred_region
        %s394 = ssub.s32 %s23, 1
        // Predicated region
        $region13: #{tpu_custom_call.1} parent=11 // pred_check
          %p395 = pneg %p82
        $region14: #{tpu_custom_call.1} parent=11 // pred_check_branch
          %397 = sbr.rel (%p395) target = $region16
        $region15: #{tpu_custom_call.1} parent=11 // pred_region
          _
        $region16: #{tpu_custom_call.1} parent=11 // pred_fallthru
          _
        // Predicated region
        $region17: #{tpu_custom_call.1} parent=11 // pred_check
          %p398 = pneg %p103
        $region18: #{tpu_custom_call.1} parent=11 // pred_check_branch
          %400 = sbr.rel (%p398) target = $region20
        $region19: #{tpu_custom_call.1} parent=11 // pred_region
          _
        $region20: #{tpu_custom_call.1} parent=11 // pred_fallthru
          _
        // Predicated region
        $region21: #{tpu_custom_call.1} parent=11 // pred_check
          %p401 = pneg %p228
        $region22: #{tpu_custom_call.1} parent=11 // pred_check_branch
          %403 = sbr.rel (%p401) target = $region24
        $region23: #{tpu_custom_call.1} parent=11 // pred_region
          _
        $region24: #{tpu_custom_call.1} parent=11 // pred_fallthru
          _
        // Predicated region
        $region25: #{tpu_custom_call.1} parent=11 // pred_check
          %p404 = pneg %p249
        $region26: #{tpu_custom_call.1} parent=11 // pred_check_branch
          %406 = sbr.rel (%p404) target = $region28
        $region27: #{tpu_custom_call.1} parent=11 // pred_region
          _
        $region28: #{tpu_custom_call.1} parent=11 // pred_fallthru
          _
        // Predicated region
        $region29: #{tpu_custom_call.1} parent=11 // pred_check
          %p407 = pneg %p270
        $region30: #{tpu_custom_call.1} parent=11 // pred_check_branch
          %409 = sbr.rel (%p407) target = $region32
        $region31: #{tpu_custom_call.1} parent=11 // pred_region
          _
        $region32: #{tpu_custom_call.1} parent=11 // pred_fallthru
          _
        // Predicated region
        $region33: #{tpu_custom_call.1} parent=11 // pred_check
          %p410 = pneg %p291
        $region34: #{tpu_custom_call.1} parent=11 // pred_check_branch
          %412 = sbr.rel (%p410) target = $region36
        $region35: #{tpu_custom_call.1} parent=11 // pred_region
          _
        $region36: #{tpu_custom_call.1} parent=11 // pred_fallthru
          _
        // Predicated region
        $region37: #{tpu_custom_call.1} parent=11 // pred_check
          %p413 = pneg %p312
        $region38: #{tpu_custom_call.1} parent=11 // pred_check_branch
          %415 = sbr.rel (%p413) target = $region40
        $region39: #{tpu_custom_call.1} parent=11 // pred_region
          _
        $region40: #{tpu_custom_call.1} parent=11 // pred_fallthru
          _
        // Predicated region
        $region41: #{tpu_custom_call.1} parent=11 // pred_check
          %p416 = pneg %p333
        $region42: #{tpu_custom_call.1} parent=11 // pred_check_branch
          %418 = sbr.rel (%p416) target = $region44
        $region43: #{tpu_custom_call.1} parent=11 // pred_region
          _
        $region44: #{tpu_custom_call.1} parent=11 // pred_fallthru
          _
        // Predicated region
        $region45: #{tpu_custom_call.1} parent=11 // pred_check
          %p419 = pneg %p354
        $region46: #{tpu_custom_call.1} parent=11 // pred_check_branch
          %421 = sbr.rel (%p419) target = $region48
        $region47: #{tpu_custom_call.1} parent=11 // pred_region
          _
        $region48: #{tpu_custom_call.1} parent=11 // pred_fallthru
          _
      $region12: #{tpu_custom_call.1} parent=5 // pred_fallthru
        _
      %p422 = scmp.lt.s32.totalorder %s23, 8
      // Predicated region
      $region49: #{tpu_custom_call.1} parent=5 // pred_check
        %p423 = pneg %p422
      $region50: #{tpu_custom_call.1} parent=5 // pred_check_branch
        %425 = sbr.rel (%p423) target = $region52
      $region51: #{tpu_custom_call.1} parent=5 // pred_region
        // Predicated region
        $region53: #{tpu_custom_call.1} parent=51 // pred_check
          %p426 = pneg %p55
        $region54: #{tpu_custom_call.1} parent=51 // pred_check_branch
          %428 = sbr.rel (%p426) target = $region56
        $region55: #{tpu_custom_call.1} parent=51 // pred_region
          %p429 = scmp.lt.s32.totalorder %s30, 1
          %s430 = scalar_select %p429, %s30, 1
          %s431 = smul.addr %s430, 8
          %s432 = scalar_lea.vmem %s0, %s431
        $region56: #{tpu_custom_call.1} parent=51 // pred_fallthru
          _
        // Predicated region
        $region57: #{tpu_custom_call.1} parent=51 // pred_check
          %p433 = pneg %p123
        $region58: #{tpu_custom_call.1} parent=51 // pred_check_branch
          %435 = sbr.rel (%p433) target = $region60
        $region59: #{tpu_custom_call.1} parent=51 // pred_region
          %p436 = scmp.lt.s32.totalorder %s31, 3
          %s437 = scalar_select %p436, %s31, 3
          %s438 = smul.addr %s437, 4
          %s439 = smul.addr %s438, 4
          %s440 = scalar_lea.vmem %s3, %s439
        $region60: #{tpu_custom_call.1} parent=51 // pred_fallthru
          _
        // Predicated region
        $region61: #{tpu_custom_call.1} parent=51 // pred_check
          %p441 = pneg %p149
        $region62: #{tpu_custom_call.1} parent=51 // pred_check_branch
          %443 = sbr.rel (%p441) target = $region64
        $region63: #{tpu_custom_call.1} parent=51 // pred_region
          %p444 = scmp.lt.s32.totalorder %s31, 3
          %s445 = scalar_select %p444, %s31, 3
          %s446 = smul.addr %s445, 4
          %s447 = smul.addr %s446, 4
          %s448 = scalar_lea.vmem %s4, %s447
        $region64: #{tpu_custom_call.1} parent=51 // pred_fallthru
          _
        // Predicated region
        $region65: #{tpu_custom_call.1} parent=51 // pred_check
          %p449 = pneg %p175
        $region66: #{tpu_custom_call.1} parent=51 // pred_check_branch
          %451 = sbr.rel (%p449) target = $region68
        $region67: #{tpu_custom_call.1} parent=51 // pred_region
          %p452 = scmp.lt.s32.totalorder %s31, 3
          %s453 = scalar_select %p452, %s31, 3
          %s454 = smul.addr %s453, 4
          %s455 = smul.addr %s454, 4
          %s456 = scalar_lea.vmem %s5, %s455
        $region68: #{tpu_custom_call.1} parent=51 // pred_fallthru
          _
        // Predicated region
        $region69: #{tpu_custom_call.1} parent=51 // pred_check
          %p457 = pneg %p201
        $region70: #{tpu_custom_call.1} parent=51 // pred_check_branch
          %459 = sbr.rel (%p457) target = $region72
        $region71: #{tpu_custom_call.1} parent=51 // pred_region
          %p460 = scmp.lt.s32.totalorder %s31, 3
          %s461 = scalar_select %p460, %s31, 3
          %s462 = smul.addr %s461, 4
          %s463 = scalar_lea.vmem %s6, %s462
        $region72: #{tpu_custom_call.1} parent=51 // pred_fallthru
          _
      $region52: #{tpu_custom_call.1} parent=5 // pred_fallthru
        _
      %p464 = scmp.le.s32.totalorder 1, %s23
      %p465 = scmp.lt.s32.totalorder %s23, 9
      %p466 = pnand %p464, %p465
      %p467 = pneg %p466
      // Predicated region
      $region73: #{tpu_custom_call.1} parent=5 // pred_check
        _
      $region74: #{tpu_custom_call.1} parent=5 // pred_check_branch
        %469 = sbr.rel (%p466) target = $region76
      $region75: #{tpu_custom_call.1} parent=5 // pred_region
        %s470 = ssub.s32 %s23, 1
        %p471 = scmp.lt.s32.totalorder %s32, 1
        %s472 = scalar_select %p471, %s32, 1
        %s473 = smul.addr %s472, 8
        %s474 = scalar_lea.vmem %s0, %s473
        %p475 = pneg %p61
        %p476 = pneg %p58
        %p477 = pneg %p82
        %p478 = pneg %p79
        %p479 = pneg %p103
        %p480 = pneg %p100
        %p481 = scmp.lt.s32.totalorder %s33, 3
        %s482 = scalar_select %p481, %s33, 3
        %s483 = smul.addr %s482, 4
        %s484 = smul.addr %s483, 4
        %s485 = scalar_lea.vmem %s3, %s484
        %p486 = pneg %p129
        %p487 = pneg %p126
        %p488 = scmp.lt.s32.totalorder %s33, 3
        %s489 = scalar_select %p488, %s33, 3
        %s490 = smul.addr %s489, 4
        %s491 = smul.addr %s490, 4
        %s492 = scalar_lea.vmem %s4, %s491
        %p493 = pneg %p155
        %p494 = pneg %p152
        %p495 = scmp.lt.s32.totalorder %s33, 3
        %s496 = scalar_select %p495, %s33, 3
        %s497 = smul.addr %s496, 4
        %s498 = smul.addr %s497, 4
        %s499 = scalar_lea.vmem %s5, %s498
        %p500 = pneg %p181
        %p501 = pneg %p178
        %p502 = scmp.lt.s32.totalorder %s33, 3
        %s503 = scalar_select %p502, %s33, 3
        %s504 = smul.addr %s503, 4
        %s505 = scalar_lea.vmem %s6, %s504
        %p506 = pneg %p207
        %p507 = pneg %p204
        %p508 = pneg %p228
        %p509 = pneg %p225
        %p510 = pneg %p249
        %p511 = pneg %p246
        %p512 = pneg %p270
        %p513 = pneg %p267
        %p514 = pneg %p291
        %p515 = pneg %p288
        %p516 = pneg %p312
        %p517 = pneg %p309
        %p518 = pneg %p333
        %p519 = pneg %p330
        %p520 = pneg %p354
        %p521 = pneg %p351
        %p522 = pneg %p380
        %p523 = pneg %p377
        %s524 = sand.u32 %s367, 1
        %s525 = scalar_lea.sflag [#allocation5], %s524
        %s526 = sand.u32 %s367, 1
        %s527 = smul.addr %s526, 8
        %s528 = scalar_lea.vmem [#allocation4], %s527
        %p529 = scmp.lt.s32.totalorder %s32, 1
        %s530 = scalar_select %p529, %s32, 1
        %s531 = smul.addr %s530, 8
        %s532 = scalar_lea.vmem %s0, %s531
        %p533 = scmp.lt.s32.totalorder %s33, 3
        %s534 = scalar_select %p533, %s33, 3
        %s535 = smul.addr %s534, 4
        %s536 = smul.addr %s535, 4
        %s537 = scalar_lea.vmem %s3, %s536
        %p538 = scmp.lt.s32.totalorder %s33, 3
        %s539 = scalar_select %p538, %s33, 3
        %s540 = smul.addr %s539, 4
        %s541 = smul.addr %s540, 4
        %s542 = scalar_lea.vmem %s4, %s541
        %p543 = scmp.lt.s32.totalorder %s33, 3
        %s544 = scalar_select %p543, %s33, 3
        %s545 = smul.addr %s544, 4
        %s546 = smul.addr %s545, 4
        %s547 = scalar_lea.vmem %s5, %s546
        %p548 = scmp.lt.s32.totalorder %s33, 3
        %s549 = scalar_select %p548, %s33, 3
        %s550 = smul.addr %s549, 4
        %s551 = scalar_lea.vmem %s6, %s550
        %p553 = scmp.eq.s32.totalorder %s33, 0
        // Predicated region
        $region77: #{tpu_custom_call.1} parent=75 // pred_check
          %p554 = pneg %p553
        $region78: #{tpu_custom_call.1} parent=75 // pred_check_branch
          %556 = sbr.rel (%p554) target = $region80
        $region79: #{tpu_custom_call.1} parent=75 // pred_region
          %v557 = vld [vmem:[%s532] sm:$0xff]
          %v558 = vld [vmem:[%s1] sm:$0x1]
          %v559 = vld [vmem:[%s2] sm:$0x1]
          %vm560 = vcmask 261120
          %v561 = vsel %vm560, %v557, 0.0
          %562 = vadd.xlane.f32.xlu0 %v561
          %v563 = vpop.xlane.xlu0 %562
          %v564 = vrcp.pop 32.0
          %v565 = vmul.f32 %v563, %v564
          %v566 = vsub.f32 %v557, %v565
          %v567 = vmul.f32 %v566, %v566
          %v568 = vsel %vm560, %v567, 0.0
          %569 = vadd.xlane.f32.xlu0 %v568
          %v570 = vpop.xlane.xlu0 %569
          %v571 = vmul.f32 %v570, %v564
          %v572 = vadd.f32 %v571, 1e-05
          %v573 = vrsqrt.pop %v572
          %v574 = vmul.f32 %v566, %v573
          %v576 = vlaneseq
          %v577 = vshrl.u32 %v576, 7
          %v578 = vsub.s32 0, %v577
          %v579 = vrot.slane %v558, %v578
          %v581 = vmul.f32 %v579, %v574
          %v583 = vlaneseq
          %v584 = vshrl.u32 %v583, 7
          %v585 = vsub.s32 0, %v584
          %v586 = vrot.slane %v559, %v585
          %v588 = vadd.f32 %v581, %v586
          %v589 = vpack.c.bf16 %v588, %v588
          %vm590 = vcmask 257024
          %591 = vst.msk [vmem:[#allocation2] sm:$0xf] %vm590, %v589
          %592 = vst.msk [vmem:[#allocation3] sm:$0xff] %vm560, 0.0
        $region80: #{tpu_custom_call.1} parent=75 // pred_fallthru
          _
        %v593 = vld [vmem:[#allocation2] sm:$0xf]
        %v594 = vld [vmem:[%s537] sm:$0xf]
        %v595 = vld [vmem:[%s537 + $0x4] sm:$0xf]
        %v596 = vld [vmem:[%s537 + $0x8] sm:$0xf]
        %v597 = vld [vmem:[%s537 + $0xc] sm:$0xf]
        %v602 = vunpack.c.l.b16 %v594
        %v603 = vunpack.c.l.b16 %v595
        %v604 = vunpack.c.l.b16 %v596
        %v605 = vunpack.c.l.b16 %v597
        %v606 = vpack.c.b16 %v603, %v602
        %v607 = vpack.c.b16 %v605, %v604
        %vm610 = vcmask 261120
        %v612 = vsel %vm610, %v593, 0
        %614 = vmatprep.subr.bf16.mxu0 0
        %615 = vmatpush1.bf16.msra.mxu0 %v606
        %616 = vmatprep.subr.bf16.mxu0 0
        %617 = vmatpush1.bf16.msra.mxu0 %v607
        %618 = vmatprep.subr.bf16.mxu0 0
        %619 = vmatpush1.bf16.msra.mxu0 0
        %620 = vmatprep.subr.bf16.mxu0 0
        %621 = vmatpush1.bf16.msra.mxu0 0
        %622 = vmatprep.subr.bf16.mxu0 0
        %623 = vmatpush1.bf16.msra.mxu0 0
        %624 = vmatprep.subr.bf16.mxu0 0
        %625 = vmatpush1.bf16.msra.mxu0 0
        %626 = vmatprep.subr.bf16.mxu0 0
        %627 = vmatpush1.bf16.msra.mxu0 0
        %628 = vmatprep.subr.bf16.mxu0 0
        %629 = vmatpush1.bf16.msra.mxu0 0
        %630 = vmatprep.subr.bf16.mxu0 0
        %631 = vmatpush1.bf16.msra.mxu0 0
        %632 = vmatprep.subr.bf16.mxu0 0
        %633 = vmatpush1.bf16.msra.mxu0 0
        %634 = vmatprep.subr.bf16.mxu0 0
        %635 = vmatpush1.bf16.msra.mxu0 0
        %636 = vmatprep.subr.bf16.mxu0 0
        %637 = vmatpush1.bf16.msra.mxu0 0
        %638 = vmatprep.subr.bf16.mxu0 0
        %639 = vmatpush1.bf16.msra.mxu0 0
        %640 = vmatprep.subr.bf16.mxu0 0
        %641 = vmatpush1.bf16.msra.mxu0 0
        %642 = vmatprep.subr.bf16.mxu0 0
        %643 = vmatpush1.bf16.msra.mxu0 0
        %644 = vmatprep.subr.bf16.mxu0 0
        %645 = vmatpush1.bf16.msra.mxu0 0
        %646 = vmatprep.mubr.bf16.mxu0 0
        %647 = vmatmul.mubr.bf16.gmra.mrb[0].mxu0 %v612
        %v648 = vpop.f32.mrb[0].mxu0
        %v649 = vadd.f32 0.0, %v648
        %v650 = vpop.f32.mrb[0].mxu0
        %v651 = vpop.f32.mrb[0].mxu0
        %v652 = vpop.f32.mrb[0].mxu0
        %653 = vdwg.mxu0
        %v654 = vld [vmem:[%s542] sm:$0xf]
        %v655 = vld [vmem:[%s542 + $0x4] sm:$0xf]
        %v656 = vld [vmem:[%s542 + $0x8] sm:$0xf]
        %v657 = vld [vmem:[%s542 + $0xc] sm:$0xf]
        %v662 = vunpack.c.l.b16 %v654
        %v663 = vunpack.c.l.b16 %v655
        %v664 = vunpack.c.l.b16 %v656
        %v665 = vunpack.c.l.b16 %v657
        %v666 = vpack.c.b16 %v663, %v662
        %v667 = vpack.c.b16 %v665, %v664
        %670 = vmatprep.subr.bf16.mxu0 0
        %671 = vmatpush1.bf16.msra.mxu0 %v666
        %672 = vmatprep.subr.bf16.mxu0 0
        %673 = vmatpush1.bf16.msra.mxu0 %v667
        %674 = vmatprep.subr.bf16.mxu0 0
        %675 = vmatpush1.bf16.msra.mxu0 0
        %676 = vmatprep.subr.bf16.mxu0 0
        %677 = vmatpush1.bf16.msra.mxu0 0
        %678 = vmatprep.subr.bf16.mxu0 0
        %679 = vmatpush1.bf16.msra.mxu0 0
        %680 = vmatprep.subr.bf16.mxu0 0
        %681 = vmatpush1.bf16.msra.mxu0 0
        %682 = vmatprep.subr.bf16.mxu0 0
        %683 = vmatpush1.bf16.msra.mxu0 0
        %684 = vmatprep.subr.bf16.mxu0 0
        %685 = vmatpush1.bf16.msra.mxu0 0
        %686 = vmatprep.subr.bf16.mxu0 0
        %687 = vmatpush1.bf16.msra.mxu0 0
        %688 = vmatprep.subr.bf16.mxu0 0
        %689 = vmatpush1.bf16.msra.mxu0 0
        %690 = vmatprep.subr.bf16.mxu0 0
        %691 = vmatpush1.bf16.msra.mxu0 0
        %692 = vmatprep.subr.bf16.mxu0 0
        %693 = vmatpush1.bf16.msra.mxu0 0
        %694 = vmatprep.subr.bf16.mxu0 0
        %695 = vmatpush1.bf16.msra.mxu0 0
        %696 = vmatprep.subr.bf16.mxu0 0
        %697 = vmatpush1.bf16.msra.mxu0 0
        %698 = vmatprep.subr.bf16.mxu0 0
        %699 = vmatpush1.bf16.msra.mxu0 0
        %700 = vmatprep.subr.bf16.mxu0 0
        %701 = vmatpush1.bf16.msra.mxu0 0
        %702 = vmatprep.mubr.bf16.mxu0 0
        %703 = vmatmul.mubr.bf16.gmra.mrb[0].mxu0 %v612
        %v704 = vpop.f32.mrb[0].mxu0
        %v705 = vadd.f32 0.0, %v704
        %v706 = vpop.f32.mrb[0].mxu0
        %v707 = vpop.f32.mrb[0].mxu0
        %v708 = vpop.f32.mrb[0].mxu0
        %709 = vdwg.mxu0
        %v710 = vld [vmem:[%s547] sm:$0xf]
        %v711 = vld [vmem:[%s547 + $0x4] sm:$0xf]
        %v712 = vld [vmem:[%s547 + $0x8] sm:$0xf]
        %v713 = vld [vmem:[%s547 + $0xc] sm:$0xf]
        %v718 = vunpack.c.l.b16 %v710
        %v719 = vunpack.c.l.b16 %v711
        %v720 = vunpack.c.l.b16 %v712
        %v721 = vunpack.c.l.b16 %v713
        %v722 = vpack.c.b16 %v719, %v718
        %v723 = vpack.c.b16 %v721, %v720
        %726 = vmatprep.subr.bf16.mxu0 0
        %727 = vmatpush1.bf16.msra.mxu0 %v722
        %728 = vmatprep.subr.bf16.mxu0 0
        %729 = vmatpush1.bf16.msra.mxu0 %v723
        %730 = vmatprep.subr.bf16.mxu0 0
        %731 = vmatpush1.bf16.msra.mxu0 0
        %732 = vmatprep.subr.bf16.mxu0 0
        %733 = vmatpush1.bf16.msra.mxu0 0
        %734 = vmatprep.subr.bf16.mxu0 0
        %735 = vmatpush1.bf16.msra.mxu0 0
        %736 = vmatprep.subr.bf16.mxu0 0
        %737 = vmatpush1.bf16.msra.mxu0 0
        %738 = vmatprep.subr.bf16.mxu0 0
        %739 = vmatpush1.bf16.msra.mxu0 0
        %740 = vmatprep.subr.bf16.mxu0 0
        %741 = vmatpush1.bf16.msra.mxu0 0
        %742 = vmatprep.subr.bf16.mxu0 0
        %743 = vmatpush1.bf16.msra.mxu0 0
        %744 = vmatprep.subr.bf16.mxu0 0
        %745 = vmatpush1.bf16.msra.mxu0 0
        %746 = vmatprep.subr.bf16.mxu0 0
        %747 = vmatpush1.bf16.msra.mxu0 0
        %748 = vmatprep.subr.bf16.mxu0 0
        %749 = vmatpush1.bf16.msra.mxu0 0
        %750 = vmatprep.subr.bf16.mxu0 0
        %751 = vmatpush1.bf16.msra.mxu0 0
        %752 = vmatprep.subr.bf16.mxu0 0
        %753 = vmatpush1.bf16.msra.mxu0 0
        %754 = vmatprep.subr.bf16.mxu0 0
        %755 = vmatpush1.bf16.msra.mxu0 0
        %756 = vmatprep.subr.bf16.mxu0 0
        %757 = vmatpush1.bf16.msra.mxu0 0
        %758 = vmatprep.mubr.bf16.mxu0 0
        %759 = vmatmul.mubr.bf16.gmra.mrb[0].mxu0 %v612
        %v760 = vpop.f32.mrb[0].mxu0
        %v761 = vadd.f32 0.0, %v760
        %v762 = vpop.f32.mrb[0].mxu0
        %v763 = vpop.f32.mrb[0].mxu0
        %v764 = vpop.f32.mrb[0].mxu0
        %765 = vdwg.mxu0
        %v766 = vpack.c.bf16 %v649, %v649
        %v767 = vpack.c.bf16 %v705, %v705
        %v768 = vpack.c.bf16 %v761, %v761
        %vm769 = vcmask 64512
        %v771 = vsel %vm769, %v766, 0
        %v774 = vsel %vm769, %v767, 0
        %776 = vmatprep.subr.bf16.mxu0 0
        %777 = vmatpush1.bf16.xpose.msra.mxu0 %v774
        %778 = vmatprep.subr.bf16.mxu0 0
        %779 = vmatpush1.bf16.xpose.msra.mxu0 0
        %780 = vmatprep.subr.bf16.mxu0 0
        %781 = vmatpush1.bf16.xpose.msra.mxu0 0
        %782 = vmatprep.subr.bf16.mxu0 0
        %783 = vmatpush1.bf16.xpose.msra.mxu0 0
        %784 = vmatprep.subr.bf16.mxu0 0
        %785 = vmatpush1.bf16.xpose.msra.mxu0 0
        %786 = vmatprep.subr.bf16.mxu0 0
        %787 = vmatpush1.bf16.xpose.msra.mxu0 0
        %788 = vmatprep.subr.bf16.mxu0 0
        %789 = vmatpush1.bf16.xpose.msra.mxu0 0
        %790 = vmatprep.subr.bf16.mxu0 0
        %791 = vmatpush1.bf16.xpose.msra.mxu0 0
        %792 = vmatprep.subr.bf16.mxu0 0
        %793 = vmatpush1.bf16.xpose.msra.mxu0 0
        %794 = vmatprep.subr.bf16.mxu0 0
        %795 = vmatpush1.bf16.xpose.msra.mxu0 0
        %796 = vmatprep.subr.bf16.mxu0 0
        %797 = vmatpush1.bf16.xpose.msra.mxu0 0
        %798 = vmatprep.subr.bf16.mxu0 0
        %799 = vmatpush1.bf16.xpose.msra.mxu0 0
        %800 = vmatprep.subr.bf16.mxu0 0
        %801 = vmatpush1.bf16.xpose.msra.mxu0 0
        %802 = vmatprep.subr.bf16.mxu0 0
        %803 = vmatpush1.bf16.xpose.msra.mxu0 0
        %804 = vmatprep.subr.bf16.mxu0 0
        %805 = vmatpush1.bf16.xpose.msra.mxu0 0
        %806 = vmatprep.subr.bf16.mxu0 0
        %807 = vmatpush1.bf16.xpose.msra.mxu0 0
        %808 = vmatprep.mubr.bf16.mxu0 0
        %809 = vmatmul.mubr.bf16.gmra.mrb[0].mxu0 %v771
        %v810 = vpop.f32.mrb[0].mxu0
        %v811 = vadd.f32 0.0, %v810
        %v812 = vpop.f32.mrb[0].mxu0
        %v813 = vpop.f32.mrb[0].mxu0
        %v814 = vpop.f32.mrb[0].mxu0
        %815 = vdwg.mxu0
        %v816 = vlaneseq
        %v817 = vshrl.u32 %v816, 7
        %v818 = vlaneseq
        %v819 = vand.u32 %v818, 127
        %vm820 = vcmp.ge.s32.totalorder %v817, %v819
        %v821 = vsel %vm820, %v811, -1e+30
        %v822 = vsel %vm769, %v821, -inf
        %823 = vmax.xlane.f32.xlu0 %v822
        %v824 = vpop.xlane.xlu0 %823
        %v825 = vsub.f32 %v821, %v824
        %v826 = vmul.f32 %v825, 1.442695
        %v827 = vpow.pop %v826
        %v828 = vsel %vm769, %v827, 0.0
        %829 = vadd.xlane.f32.xlu0 %v828
        %v830 = vpop.xlane.xlu0 %829
        %v831 = vpack.c.bf16 %v827, %v827
        %v833 = vsel %vm769, %v831, 0
        %vm835 = vcmask 1043456
        %v837 = vsel %vm835, %v768, 0
        %839 = vmatprep.subr.bf16.mxu0 0
        %840 = vmatpush1.bf16.msra.mxu0 %v837
        %841 = vmatprep.subr.bf16.mxu0 0
        %842 = vmatpush1.bf16.msra.mxu0 0
        %843 = vmatprep.subr.bf16.mxu0 0
        %844 = vmatpush1.bf16.msra.mxu0 0
        %845 = vmatprep.subr.bf16.mxu0 0
        %846 = vmatpush1.bf16.msra.mxu0 0
        %847 = vmatprep.subr.bf16.mxu0 0
        %848 = vmatpush1.bf16.msra.mxu0 0
        %849 = vmatprep.subr.bf16.mxu0 0
        %850 = vmatpush1.bf16.msra.mxu0 0
        %851 = vmatprep.subr.bf16.mxu0 0
        %852 = vmatpush1.bf16.msra.mxu0 0
        %853 = vmatprep.subr.bf16.mxu0 0
        %854 = vmatpush1.bf16.msra.mxu0 0
        %855 = vmatprep.subr.bf16.mxu0 0
        %856 = vmatpush1.bf16.msra.mxu0 0
        %857 = vmatprep.subr.bf16.mxu0 0
        %858 = vmatpush1.bf16.msra.mxu0 0
        %859 = vmatprep.subr.bf16.mxu0 0
        %860 = vmatpush1.bf16.msra.mxu0 0
        %861 = vmatprep.subr.bf16.mxu0 0
        %862 = vmatpush1.bf16.msra.mxu0 0
        %863 = vmatprep.subr.bf16.mxu0 0
        %864 = vmatpush1.bf16.msra.mxu0 0
        %865 = vmatprep.subr.bf16.mxu0 0
        %866 = vmatpush1.bf16.msra.mxu0 0
        %867 = vmatprep.subr.bf16.mxu0 0
        %868 = vmatpush1.bf16.msra.mxu0 0
        %869 = vmatprep.subr.bf16.mxu0 0
        %870 = vmatpush1.bf16.msra.mxu0 0
        %871 = vmatprep.mubr.bf16.mxu0 0
        %872 = vmatmul.mubr.bf16.gmra.mrb[0].mxu0 %v833
        %v873 = vpop.f32.mrb[0].mxu0
        %v874 = vadd.f32 0.0, %v873
        %v875 = vpop.f32.mrb[0].mxu0
        %v876 = vpop.f32.mrb[0].mxu0
        %v877 = vpop.f32.mrb[0].mxu0
        %878 = vdwg.mxu0
        %v879 = vrcp.pop %v830
        %v880 = vmul.f32 1.0, %v879
        %v881 = vmul.f32 %v874, %v880
        %v882 = vld [vmem:[#allocation3] sm:$0xff]
        %v883 = vpack.c.bf16 %v881, %v881
        %v884 = vld [vmem:[%s551] sm:$0xf]
        %v886 = vsel %vm769, %v883, 0
        %v889 = vsel %vm835, %v884, 0
        %891 = vmatprep.subr.bf16.mxu0 0
        %892 = vmatpush1.bf16.msra.mxu0 %v889
        %893 = vmatprep.subr.bf16.mxu0 0
        %894 = vmatpush1.bf16.msra.mxu0 0
        %895 = vmatprep.subr.bf16.mxu0 0
        %896 = vmatpush1.bf16.msra.mxu0 0
        %897 = vmatprep.subr.bf16.mxu0 0
        %898 = vmatpush1.bf16.msra.mxu0 0
        %899 = vmatprep.subr.bf16.mxu0 0
        %900 = vmatpush1.bf16.msra.mxu0 0
        %901 = vmatprep.subr.bf16.mxu0 0
        %902 = vmatpush1.bf16.msra.mxu0 0
        %903 = vmatprep.subr.bf16.mxu0 0
        %904 = vmatpush1.bf16.msra.mxu0 0
        %905 = vmatprep.subr.bf16.mxu0 0
        %906 = vmatpush1.bf16.msra.mxu0 0
        %907 = vmatprep.subr.bf16.mxu0 0
        %908 = vmatpush1.bf16.msra.mxu0 0
        %909 = vmatprep.subr.bf16.mxu0 0
        %910 = vmatpush1.bf16.msra.mxu0 0
        %911 = vmatprep.subr.bf16.mxu0 0
        %912 = vmatpush1.bf16.msra.mxu0 0
        %913 = vmatprep.subr.bf16.mxu0 0
        %914 = vmatpush1.bf16.msra.mxu0 0
        %915 = vmatprep.subr.bf16.mxu0 0
        %916 = vmatpush1.bf16.msra.mxu0 0
        %917 = vmatprep.subr.bf16.mxu0 0
        %918 = vmatpush1.bf16.msra.mxu0 0
        %919 = vmatprep.subr.bf16.mxu0 0
        %920 = vmatpush1.bf16.msra.mxu0 0
        %921 = vmatprep.subr.bf16.mxu0 0
        %922 = vmatpush1.bf16.msra.mxu0 0
        %923 = vmatprep.mubr.bf16.mxu0 0
        %924 = vmatmul.mubr.bf16.gmra.mrb[0].mxu0 %v886
        %v925 = vpop.f32.mrb[0].mxu0
        %v926 = vadd.f32 0.0, %v925
        %v927 = vpop.f32.mrb[0].mxu0
        %v928 = vpop.f32.mrb[0].mxu0
        %v929 = vpop.f32.mrb[0].mxu0
        %930 = vdwg.mxu0
        %v931 = vadd.f32 %v882, %v926
        %932 = vst.msk [vmem:[#allocation3] sm:$0xff] %vm610, %v931
        %p933 = scmp.eq.s32.totalorder %s33, 3
        // Predicated region
        $region81: #{tpu_custom_call.1} parent=75 // pred_check
          %p934 = pneg %p933
        $region82: #{tpu_custom_call.1} parent=75 // pred_check_branch
          %936 = sbr.rel (%p934) target = $region84
        $region83: #{tpu_custom_call.1} parent=75 // pred_region
          %v937 = vld [vmem:[%s532] sm:$0xff]
          %v938 = vld [vmem:[#allocation3] sm:$0xff]
          %v939 = vadd.f32 %v937, %v938
          %v940 = vld [vmem:[%s7] sm:$0x1]
          %v942 = vlaneseq
          %v943 = vshrl.u32 %v942, 7
          %v944 = vsub.s32 0, %v943
          %v945 = vrot.slane %v940, %v944
          %v947 = vadd.f32 %v939, %v945
          %v948 = vld [vmem:[%s8] sm:$0x1]
          %v949 = vld [vmem:[%s9] sm:$0x1]
          %v950 = vsel %vm610, %v947, 0.0
          %951 = vadd.xlane.f32.xlu0 %v950
          %v952 = vpop.xlane.xlu0 %951
          %v953 = vrcp.pop 32.0
          %v954 = vmul.f32 %v952, %v953
          %v955 = vsub.f32 %v947, %v954
          %v956 = vmul.f32 %v955, %v955
          %v957 = vsel %vm610, %v956, 0.0
          %958 = vadd.xlane.f32.xlu0 %v957
          %v959 = vpop.xlane.xlu0 %958
          %v960 = vmul.f32 %v959, %v953
          %v961 = vadd.f32 %v960, 1e-05
          %v962 = vrsqrt.pop %v961
          %v963 = vmul.f32 %v955, %v962
          %v965 = vlaneseq
          %v966 = vshrl.u32 %v965, 7
          %v967 = vsub.s32 0, %v966
          %v968 = vrot.slane %v948, %v967
          %v970 = vmul.f32 %v968, %v963
          %v972 = vlaneseq
          %v973 = vshrl.u32 %v972, 7
          %v974 = vsub.s32 0, %v973
          %v975 = vrot.slane %v949, %v974
          %v977 = vadd.f32 %v970, %v975
          %v978 = vpack.c.bf16 %v977, %v977
          %v979 = vld [vmem:[%s10] sm:$0xf]
          %v980 = vld [vmem:[%s10 + $0x4] sm:$0xf]
          %v981 = vld [vmem:[%s10 + $0x8] sm:$0xf]
          %v982 = vld [vmem:[%s10 + $0xc] sm:$0xf]
          %v983 = vld [vmem:[%s11] sm:$0x1]
          %v985 = vlaneseq
          %v986 = vshrl.u32 %v985, 7
          %v987 = vsub.s32 0, %v986
          %v988 = vrot.slane %v983, %v987
          %v994 = vunpack.c.l.b16 %v979
          %v995 = vunpack.c.l.b16 %v980
          %v996 = vunpack.c.l.b16 %v981
          %v997 = vunpack.c.l.b16 %v982
          %v998 = vpack.c.b16 %v995, %v994
          %v999 = vpack.c.b16 %v997, %v996
          %v1003 = vsel %vm610, %v978, 0
          %1005 = vmatprep.subr.bf16.mxu0 0
          %1006 = vmatpush1.bf16.msra.mxu0 %v998
          %1007 = vmatprep.subr.bf16.mxu0 0
          %1008 = vmatpush1.bf16.msra.mxu0 %v999
          %1009 = vmatprep.subr.bf16.mxu0 0
          %1010 = vmatpush1.bf16.msra.mxu0 0
          %1011 = vmatprep.subr.bf16.mxu0 0
          %1012 = vmatpush1.bf16.msra.mxu0 0
          %1013 = vmatprep.subr.bf16.mxu0 0
          %1014 = vmatpush1.bf16.msra.mxu0 0
          %1015 = vmatprep.subr.bf16.mxu0 0
          %1016 = vmatpush1.bf16.msra.mxu0 0
          %1017 = vmatprep.subr.bf16.mxu0 0
          %1018 = vmatpush1.bf16.msra.mxu0 0
          %1019 = vmatprep.subr.bf16.mxu0 0
          %1020 = vmatpush1.bf16.msra.mxu0 0
          %1021 = vmatprep.subr.bf16.mxu0 0
          %1022 = vmatpush1.bf16.msra.mxu0 0
          %1023 = vmatprep.subr.bf16.mxu0 0
          %1024 = vmatpush1.bf16.msra.mxu0 0
          %1025 = vmatprep.subr.bf16.mxu0 0
          %1026 = vmatpush1.bf16.msra.mxu0 0
          %1027 = vmatprep.subr.bf16.mxu0 0
          %1028 = vmatpush1.bf16.msra.mxu0 0
          %1029 = vmatprep.subr.bf16.mxu0 0
          %1030 = vmatpush1.bf16.msra.mxu0 0
          %1031 = vmatprep.subr.bf16.mxu0 0
          %1032 = vmatpush1.bf16.msra.mxu0 0
          %1033 = vmatprep.subr.bf16.mxu0 0
          %1034 = vmatpush1.bf16.msra.mxu0 0
          %1035 = vmatprep.subr.bf16.mxu0 0
          %1036 = vmatpush1.bf16.msra.mxu0 0
          %1037 = vmatprep.mubr.bf16.mxu0 0
          %1038 = vmatmul.mubr.bf16.gmra.mrb[0].mxu0 %v1003
          %v1039 = vpop.f32.mrb[0].mxu0
          %v1040 = vadd.f32 %v988, %v1039
          %v1041 = vpop.f32.mrb[0].mxu0
          %v1042 = vpop.f32.mrb[0].mxu0
          %v1043 = vpop.f32.mrb[0].mxu0
          %1044 = vdwg.mxu0
          %v1045 = vmul.f32 %v1040, 0.5
          %v1046 = vmul.f32 %v1040, 0.044715
          %v1047 = vmul.f32 %v1046, %v1040
          %v1048 = vmul.f32 %v1047, %v1040
          %v1049 = vadd.f32 %v1040, %v1048
          %v1050 = vmul.f32 %v1049, 0.7978846
          %v1051 = vtanh.pop %v1050
          %v1052 = vadd.f32 %v1051, 1.0
          %v1053 = vmul.f32 %v1045, %v1052
          %v1054 = vpack.c.bf16 %v1053, %v1053
          %v1055 = vld [vmem:[%s12] sm:$0xf]
          %v1056 = vld [vmem:[%s12 + $0x4] sm:$0xf]
          %v1057 = vld [vmem:[%s12 + $0x8] sm:$0xf]
          %v1058 = vld [vmem:[%s12 + $0xc] sm:$0xf]
          %v1059 = vld [vmem:[%s12 + $0x10] sm:$0xf]
          %v1060 = vld [vmem:[%s12 + $0x14] sm:$0xf]
          %v1061 = vld [vmem:[%s12 + $0x18] sm:$0xf]
          %v1062 = vld [vmem:[%s12 + $0x1c] sm:$0xf]
          %v1063 = vld [vmem:[%s12 + $0x20] sm:$0xf]
          %v1064 = vld [vmem:[%s12 + $0x24] sm:$0xf]
          %v1065 = vld [vmem:[%s12 + $0x28] sm:$0xf]
          %v1066 = vld [vmem:[%s12 + $0x2c] sm:$0xf]
          %v1067 = vld [vmem:[%s12 + $0x30] sm:$0xf]
          %v1068 = vld [vmem:[%s12 + $0x34] sm:$0xf]
          %v1069 = vld [vmem:[%s12 + $0x38] sm:$0xf]
          %v1070 = vld [vmem:[%s12 + $0x3c] sm:$0xf]
          %v1071 = vld [vmem:[%s13] sm:$0x1]
          %v1073 = vlaneseq
          %v1074 = vshrl.u32 %v1073, 7
          %v1075 = vsub.s32 0, %v1074
          %v1076 = vrot.slane %v1071, %v1075
          %v1094 = vunpack.c.l.b16 %v1055
          %v1095 = vunpack.c.l.b16 %v1056
          %v1096 = vunpack.c.l.b16 %v1057
          %v1097 = vunpack.c.l.b16 %v1058
          %v1098 = vunpack.c.l.b16 %v1059
          %v1099 = vunpack.c.l.b16 %v1060
          %v1100 = vunpack.c.l.b16 %v1061
          %v1101 = vunpack.c.l.b16 %v1062
          %v1102 = vunpack.c.l.b16 %v1063
          %v1103 = vunpack.c.l.b16 %v1064
          %v1104 = vunpack.c.l.b16 %v1065
          %v1105 = vunpack.c.l.b16 %v1066
          %v1106 = vunpack.c.l.b16 %v1067
          %v1107 = vunpack.c.l.b16 %v1068
          %v1108 = vunpack.c.l.b16 %v1069
          %v1109 = vunpack.c.l.b16 %v1070
          %v1110 = vpack.c.b16 %v1095, %v1094
          %v1111 = vpack.c.b16 %v1097, %v1096
          %v1112 = vpack.c.b16 %v1099, %v1098
          %v1113 = vpack.c.b16 %v1101, %v1100
          %v1114 = vpack.c.b16 %v1103, %v1102
          %v1115 = vpack.c.b16 %v1105, %v1104
          %v1116 = vpack.c.b16 %v1107, %v1106
          %v1117 = vpack.c.b16 %v1109, %v1108
          %1126 = vmatprep.subr.bf16.mxu0 0
          %1127 = vmatpush1.bf16.msra.mxu0 %v1110
          %1128 = vmatprep.subr.bf16.mxu0 0
          %1129 = vmatpush1.bf16.msra.mxu0 %v1111
          %1130 = vmatprep.subr.bf16.mxu0 0
          %1131 = vmatpush1.bf16.msra.mxu0 %v1112
          %1132 = vmatprep.subr.bf16.mxu0 0
          %1133 = vmatpush1.bf16.msra.mxu0 %v1113
          %1134 = vmatprep.subr.bf16.mxu0 0
          %1135 = vmatpush1.bf16.msra.mxu0 %v1114
          %1136 = vmatprep.subr.bf16.mxu0 0
          %1137 = vmatpush1.bf16.msra.mxu0 %v1115
          %1138 = vmatprep.subr.bf16.mxu0 0
          %1139 = vmatpush1.bf16.msra.mxu0 %v1116
          %1140 = vmatprep.subr.bf16.mxu0 0
          %1141 = vmatpush1.bf16.msra.mxu0 %v1117
          %1142 = vmatprep.subr.bf16.mxu0 0
          %1143 = vmatpush1.bf16.msra.mxu0 0
          %1144 = vmatprep.subr.bf16.mxu0 0
          %1145 = vmatpush1.bf16.msra.mxu0 0
          %1146 = vmatprep.subr.bf16.mxu0 0
          %1147 = vmatpush1.bf16.msra.mxu0 0
          %1148 = vmatprep.subr.bf16.mxu0 0
          %1149 = vmatpush1.bf16.msra.mxu0 0
          %1150 = vmatprep.subr.bf16.mxu0 0
          %1151 = vmatpush1.bf16.msra.mxu0 0
          %1152 = vmatprep.subr.bf16.mxu0 0
          %1153 = vmatpush1.bf16.msra.mxu0 0
          %1154 = vmatprep.subr.bf16.mxu0 0
          %1155 = vmatpush1.bf16.msra.mxu0 0
          %1156 = vmatprep.subr.bf16.mxu0 0
          %1157 = vmatpush1.bf16.msra.mxu0 0
          %1158 = vmatprep.mubr.bf16.mxu0 0
          %1159 = vmatmul.mubr.bf16.gmra.mrb[0].mxu0 %v1054
          %v1160 = vpop.f32.mrb[0].mxu0
          %v1161 = vadd.f32 %v1076, %v1160
          %v1162 = vpop.f32.mrb[0].mxu0
          %v1163 = vpop.f32.mrb[0].mxu0
          %v1164 = vpop.f32.mrb[0].mxu0
          %1165 = vdwg.mxu0
          %v1166 = vadd.f32 %v947, %v1161
          %1167 = vst.msk [vmem:[%s528] sm:$0xff] %vm610, %v1166
        $region84: #{tpu_custom_call.1} parent=75 // pred_fallthru
          _
        %s1168 = sand.u32 %s367, 1
        %s1169 = scalar_lea.sflag [#allocation5], %s1168
        %s1170 = sand.u32 %s367, 1
        %s1171 = smul.addr %s1170, 8
        %s1172 = scalar_lea.vmem [#allocation4], %s1171
        // Predicated region
        $region85: #{tpu_custom_call.1} parent=75 // pred_check
          %p1173 = pneg %p377
        $region86: #{tpu_custom_call.1} parent=75 // pred_check_branch
          %1175 = sbr.rel (%p1173) target = $region88
        $region87: #{tpu_custom_call.1} parent=75 // pred_region
          %s1177 = ssub.s32 128, 128
          %1178 = vsyncadd %s1169, %s1177
          %s1179 = smul.addr %s32, 128
          %s1180 = scalar_lea.hbm %s14, %s1179
          %s1182 = sshll.u32 %s1172, 4
          %s1183 = int_to_ptr.vmem [resolvable:$true] %s1182
          %1185 = dma.vmem_to_hbm [thread:$0]  %s1183, 128, %s1180, %s1169
        $region88: #{tpu_custom_call.1} parent=75 // pred_fallthru
          _
      $region76: #{tpu_custom_call.1} parent=5 // pred_fallthru
        _
      %p1186 = scmp.le.s32.totalorder 2, %s23
      // Predicated region
      $region89: #{tpu_custom_call.1} parent=5 // pred_check
        %p1187 = pneg %p1186
      $region90: #{tpu_custom_call.1} parent=5 // pred_check_branch
        %1189 = sbr.rel (%p1187) target = $region92
      $region91: #{tpu_custom_call.1} parent=5 // pred_region
        %s1190 = ssub.s32 %s23, 2
        // Predicated region
        $region93: #{tpu_custom_call.1} parent=91 // pred_check
          %p1191 = pneg %p383
        $region94: #{tpu_custom_call.1} parent=91 // pred_check_branch
          %1193 = sbr.rel (%p1191) target = $region96
        $region95: #{tpu_custom_call.1} parent=91 // pred_region
          %s1194 = sand.u32 %s368, 1
          %s1195 = scalar_lea.sflag [#allocation5], %s1194
          %s1196 = sand.u32 %s368, 1
          %s1197 = smul.addr %s1196, 8
          %s1198 = scalar_lea.vmem [#allocation4], %s1197
          %1199 = dma.done %s1195, 128
        $region96: #{tpu_custom_call.1} parent=91 // pred_fallthru
          _
      $region92: #{tpu_custom_call.1} parent=5 // pred_fallthru
        _
    $region6: #{tpu_custom_call.1} parent=1 // loop_footer
      %s27 = sadd.s32 1, %s23
    $region7: #{tpu_custom_call.1} parent=1 // loop_footer_branch
      %22 = sbr.rel target = $region3
    $region8: #{tpu_custom_call.1} parent=1 // loop_exit
      _
    %1200 = vsyncpa [#allocation5], 1
    %s1201 = scalar_lea.sflag [#allocation5], 1
    %1202 = vsyncpa %s1201, 1

</llo_original>
